<compile_context>
chip_gen: v7x
topology: tpu7x:2x2x1
jax: 0.10.0
libtpu: 0.0.40
codegen_flags: <defaults>
</compile_context>

<pallas_src>
import functools

import jax
import jax.numpy as jnp
from jax.experimental import pallas as pl
from jax.experimental.pallas import tpu as pltpu

_LANES = 128
_MIB = 1 << 20
# Below this input size, a pallas_call only adds launch latency over fused XLA.
_SMALL_FALLBACK_BYTES = 32 * 1024


def _kt_lambda_kernel(x_ref, o_ref, *, transform_func):
    # Hot path: apply the user transform on the whole VMEM block; cast only at
    # the final store (no-op when dtypes already match).
    o_ref[...] = transform_func(x_ref[...]).astype(o_ref.dtype)


def _sublane_multiple(*dtypes):
    # Row granularity: 8 for 32-bit, 16 for 16-bit, 32 for 8-bit dtypes keeps
    # packed-sublane vregs and DMA bursts dense.
    min_itemsize = min(int(jnp.dtype(d).itemsize) for d in dtypes)
    return max(8, 32 // max(1, min_itemsize))


@functools.lru_cache(maxsize=None)
def _total_vmem_budget_bytes():
    # Total budget for the double-buffered in+out blocks.  v5e/v6e: 128 MiB
    # VMEM -> 32 MiB budget (8 MiB f32 blocks per side); v7x: 64 MiB VMEM ->
    # 32 MiB budget.  Clamped so we never exceed half of physical VMEM.
    cap = 64 * _MIB  # conservative default if the query is unavailable
    try:
        info = pltpu.get_tpu_info()
        cap = int(getattr(info, "vmem_capacity_bytes", cap))
    except Exception:
        pass
    return max(16 * _MIB, min(32 * _MIB, cap // 2))


def _run_2d(x2d, transform_func, out_dtype):
    """Run the element-wise kernel over a lane-dense [rows, 128] view."""
    rows, lanes = x2d.shape
    in_dtype = x2d.dtype

    sub = _sublane_multiple(in_dtype, out_dtype)
    in_sz = int(jnp.dtype(in_dtype).itemsize)
    out_sz = int(jnp.dtype(out_dtype).itemsize)

    # Double-buffered input + output footprint per block row.
    bytes_per_row = 2 * lanes * (in_sz + out_sz)
    budget = _total_vmem_budget_bytes()
    target_rows = max(sub, (budget // bytes_per_row) // sub * sub)

    # Small arrays: one full-array block (block_shape == full dim is allowed
    # even when not a multiple of 8).  Large arrays: tiled; the trailing
    # partial block is handled by Pallas' masked out-of-bounds stores.
    block_rows = rows if rows <= target_rows else target_rows
    grid = (pl.cdiv(rows, block_rows),)

    # Explicit scoped-VMEM limit covering the actual double-buffered footprint
    # plus margin (v5e's default is only 16 MiB).
    footprint = 2 * block_rows * lanes * (in_sz + out_sz)
    vmem_limit = int(min(60 * _MIB, footprint + 4 * _MIB))

    kernel = functools.partial(_kt_lambda_kernel, transform_func=transform_func)
    return pl.pallas_call(
        kernel,
        out_shape=jax.ShapeDtypeStruct((rows, lanes), out_dtype),
        grid_spec=pltpu.PrefetchScalarGridSpec(
            num_scalar_prefetch=0,
            grid=grid,
            in_specs=[pl.BlockSpec((block_rows, lanes), lambda i: (i, 0))],
            out_specs=pl.BlockSpec((block_rows, lanes), lambda i: (i, 0)),
        ),
        compiler_params=pltpu.CompilerParams(
            dimension_semantics=("parallel",),
            vmem_limit_bytes=vmem_limit,
        ),
    )(x2d)


def kt_lambda(transform_func):
    """Pallas equivalent of ktLambda(transform_func).

    `transform_func` must be an element-wise, jnp-traceable callable (mirrors
    the torch callable passed to ktLambda).  Output dtype follows whatever the
    callable returns.
    """

    def apply(x):
        orig_shape = x.shape

        # Derive output dtype/shape from the callable itself.
        out_aval = jax.eval_shape(
            lambda t: transform_func(t),
            jax.ShapeDtypeStruct(x.shape, x.dtype))
        if out_aval.shape != tuple(orig_shape):
            raise ValueError(
                "kt_lambda Pallas kernel only supports element-wise "
                f"(shape-preserving) transforms; got {orig_shape} -> "
                f"{out_aval.shape}.")
        out_dtype = out_aval.dtype

        n = int(x.size)
        in_bytes = n * int(jnp.dtype(x.dtype).itemsize)

        # Small-input fallback: XLA already fuses a pointwise op at roofline;
        # a single-block pallas_call would only add launch latency.
        if n == 0 or in_bytes < _SMALL_FALLBACK_BYTES:
            return transform_func(x)

        flat = x.reshape(-1)
        n_aligned = (n // _LANES) * _LANES

        if n_aligned == n:
            # Common case: zero-copy reshape to a lane-dense 2-D view.
            rows = n // _LANES
            out2d = _run_2d(flat.reshape(rows, _LANES), transform_func, out_dtype)
            return out2d.reshape(orig_shape)

        if n_aligned == 0:
            return transform_func(x)

        # Ragged size: 128-aligned prefix through the kernel, <128-element tail
        # through plain XLA, stitched with one concatenate.  No padded values
        # ever pass through transform_func.
        prefix = flat[:n_aligned].reshape(n_aligned // _LANES, _LANES)
        out_prefix = _run_2d(prefix, transform_func, out_dtype).reshape(-1)
        out_tail = transform_func(flat[n_aligned:]).astype(out_dtype)
        return jnp.concatenate([out_prefix, out_tail]).reshape(orig_shape)

    return apply


if __name__ == "__main__":
    key = jax.random.PRNGKey(0)

    # ktLambda(lambda t: torch.tanh(t) * 2.0 + 0.5)
    transform = lambda t: jnp.tanh(t) * 2.0 + 0.5
    module = kt_lambda(transform)

    # 1) Main kernel path: NCHW input, flattened size a multiple of 128.
    x = jax.random.normal(key, (4, 32, 64, 64), dtype=jnp.float32)
    y = jax.block_until_ready(module(x))
    y_ref = transform(x)
    assert y.shape == x.shape and y.dtype == y_ref.dtype
    assert jnp.allclose(y, y_ref, atol=1e-6, rtol=1e-6)

    # 2) Small input -> plain-XLA fallback (kernel would only add latency).
    k2 = jax.random.fold_in(key, 1)
    x2 = jax.random.normal(k2, (2, 4, 16, 16), dtype=jnp.float32)
    y2 = jax.block_until_ready(module(x2))
    assert y2.shape == x2.shape
    assert jnp.allclose(y2, transform(x2), atol=1e-6, rtol=1e-6)

    # 3) Ragged flattened size (not a multiple of 128): aligned prefix through
    #    the kernel, <128-element tail via XLA, stitched.
    k3 = jax.random.fold_in(key, 2)
    x3 = jax.random.normal(k3, (17, 33, 31), dtype=jnp.float32)  # 17391 elems
    y3 = jax.block_until_ready(module(x3))
    assert y3.shape == x3.shape
    assert jnp.allclose(y3, transform(x3), atol=1e-6, rtol=1e-6)

    # 4) Dtype-changing transform (f32 -> bf16) preserved end to end.
    narrow = lambda t: (t * 0.5).astype(jnp.bfloat16)
    narrowing = kt_lambda(narrow)
    y4 = jax.block_until_ready(narrowing(x))
    assert y4.dtype == jnp.bfloat16 and y4.shape == x.shape
    assert jnp.allclose(y4.astype(jnp.float32),
                        narrow(x).astype(jnp.float32), atol=1e-2, rtol=1e-2)

    print("KERNEL_OK")
</pallas_src>

<mosaic_0001>
module attributes {stable_mosaic.version = 11 : i64} {
  func.func @_kt_lambda_kernel(%arg0: i32, %arg1: memref<4096x128xf32, #tpu.memory_space<vmem>>, %arg2: memref<4096x128xf32, #tpu.memory_space<vmem>>) attributes {dimension_semantics = [#tpu.dimension_semantics<parallel>], iteration_bounds = array<i64: 1>, scalar_prefetch = 0 : i64, scratch_operands = 0 : i64, tpu.core_type = #tpu.core_type<tc>, window_params = [{transform_indices = @transform_0, window_bounds = array<i64: 4096, 128>}, {transform_indices = @transform_1, window_bounds = array<i64: 4096, 128>}]} {
    %c0 = arith.constant 0 : index
    %c0_0 = arith.constant 0 : index
    %0 = vector.load %arg1[%c0, %c0_0] : memref<4096x128xf32, #tpu.memory_space<vmem>>, vector<4096x128xf32>
    %1 = math.tanh %0 : vector<4096x128xf32>
    %cst = arith.constant 2.000000e+00 : f32
    %2 = vector.broadcast %cst : f32 to vector<4096x128xf32>
    %3 = arith.mulf %1, %2 : vector<4096x128xf32>
    %cst_1 = arith.constant 5.000000e-01 : f32
    %4 = vector.broadcast %cst_1 : f32 to vector<4096x128xf32>
    %5 = arith.addf %3, %4 : vector<4096x128xf32>
    %c0_2 = arith.constant 0 : index
    %c0_3 = arith.constant 0 : index
    %6 = vector.load %arg2[%c0_2, %c0_3] : memref<4096x128xf32, #tpu.memory_space<vmem>>, vector<4096x128xf32>
    tpu.vector_store %arg2[%c0_2, %c0_3], %5 {strides = array<i32>} : memref<4096x128xf32, #tpu.memory_space<vmem>>, vector<4096x128xf32>,
    return
  }
  func.func @transform_0(%arg0: i32) -> (i32, i32) {
    %c0_i32 = arith.constant 0 : i32
    %c0_i32_0 = arith.constant 0 : i32
    return %arg0, %c0_i32 : i32, i32
  }
  func.func @transform_1(%arg0: i32) -> (i32, i32) {
    %c0_i32 = arith.constant 0 : i32
    %c0_i32_0 = arith.constant 0 : i32
    return %arg0, %c0_i32 : i32, i32
  }
}

</mosaic_0001>

<llo_original>
// kernel: tpu_custom_call.1
$region0: #{tpu_custom_call.1}
  #allocation0 [shape = 'u32[]', space=smem, size = 0x4, offset = 0x4, fixed_abs, tag = 'smem constant byte address 0x4 - core index']
  #allocation1 [shape = 'u32[144,128]{1,0:T(1,128)}', space=vmem, size = 0x12000, scoped, tag = 'internal scratch']
  %s0 = inlined_call_operand.hbm [shape: f32[4096,128], index: 0, kind: input, shape index: {}]
  %s1 = inlined_call_operand.hbm [shape: f32[4096,128], index: 1, kind: output, shape index: {}]
  %s2 = sld [smem:[#allocation0]]
  $region18: #{tpu_custom_call.1} parent=0
    _
  %s4 = ssub.s32 1, %s2
  %s5 = scalar_select 0, %s4, %s2
  $region1: #{tpu_custom_call.1} parent=0
    #allocation2 [shape = 'u8[2097152]{0}', space=vmem, size = 0x200000, scoped, tag = 'input window, operand 0, single buffered']
    #allocation3 [shape = 's32[1]{0}', space=sflag, size = 0x4, scoped, tag = 'scoped memory for tpu_custom_call.1']
    #allocation4 [shape = 's32[1]{0}', space=sflag, size = 0x4, scoped, tag = 'scoped memory for tpu_custom_call.1']
    #allocation5 [shape = 'u8[2097152]{0}', space=vmem, size = 0x200000, scoped, tag = 'output window, operand 0, single buffered']
    %6 = vsyncpa [#allocation3], 0
    %7 = vsyncpa [#allocation4], 0
    // Predicated region
    $region2: #{tpu_custom_call.1} parent=1 // pred_check
      _
    $region3: #{tpu_custom_call.1} parent=1 // pred_check_branch
      %9 = sbr.rel (0) target = $region5
    $region4: #{tpu_custom_call.1} parent=1 // pred_region
      %s11 = ssub.s32 65536, 65536
      %12 = vsyncadd [#allocation3], %s11
      %s13 = sshll.u32 [#allocation2], 4
      %s14 = int_to_ptr.vmem [resolvable:$true] %s13
      %19 = dma.hbm_to_vmem [thread:$0]  %s0, 65536, %s14, [#allocation3], 128, 128, 8
    $region5: #{tpu_custom_call.1} parent=1 // pred_fallthru
      _
    // Predicated region
    $region6: #{tpu_custom_call.1} parent=1 // pred_check
      _
    $region7: #{tpu_custom_call.1} parent=1 // pred_check_branch
      %21 = sbr.rel (0) target = $region9
    $region8: #{tpu_custom_call.1} parent=1 // pred_region
      %22 = dma.done [#allocation3], 65536
    $region9: #{tpu_custom_call.1} parent=1 // pred_fallthru
      _
    %v23 = vld [vmem:[#allocation2] sm:$0xff]
    %v24 = vld [vmem:[#allocation2 + $0x8] sm:$0xff]
    %v25 = vld [vmem:[#allocation2 + $0x10] sm:$0xff]
    %v26 = vld [vmem:[#allocation2 + $0x18] sm:$0xff]
    %v27 = vld [vmem:[#allocation2 + $0x20] sm:$0xff]
    %v28 = vld [vmem:[#allocation2 + $0x28] sm:$0xff]
    %v29 = vld [vmem:[#allocation2 + $0x30] sm:$0xff]
    %v30 = vld [vmem:[#allocation2 + $0x38] sm:$0xff]
    %v31 = vld [vmem:[#allocation2 + $0x40] sm:$0xff]
    %v32 = vld [vmem:[#allocation2 + $0x48] sm:$0xff]
    %v33 = vld [vmem:[#allocation2 + $0x50] sm:$0xff]
    %v34 = vld [vmem:[#allocation2 + $0x58] sm:$0xff]
    %v35 = vld [vmem:[#allocation2 + $0x60] sm:$0xff]
    %v36 = vld [vmem:[#allocation2 + $0x68] sm:$0xff]
    %v37 = vld [vmem:[#allocation2 + $0x70] sm:$0xff]
    %v38 = vld [vmem:[#allocation2 + $0x78] sm:$0xff]
    %v39 = vld [vmem:[#allocation2 + $0x80] sm:$0xff]
    %v40 = vld [vmem:[#allocation2 + $0x88] sm:$0xff]
    %v41 = vld [vmem:[#allocation2 + $0x90] sm:$0xff]
    %v42 = vld [vmem:[#allocation2 + $0x98] sm:$0xff]
    %v43 = vld [vmem:[#allocation2 + $0xa0] sm:$0xff]
    %v44 = vld [vmem:[#allocation2 + $0xa8] sm:$0xff]
    %v45 = vld [vmem:[#allocation2 + $0xb0] sm:$0xff]
    %v46 = vld [vmem:[#allocation2 + $0xb8] sm:$0xff]
    %v47 = vld [vmem:[#allocation2 + $0xc0] sm:$0xff]
    %v48 = vld [vmem:[#allocation2 + $0xc8] sm:$0xff]
    %v49 = vld [vmem:[#allocation2 + $0xd0] sm:$0xff]
    %v50 = vld [vmem:[#allocation2 + $0xd8] sm:$0xff]
    %v51 = vld [vmem:[#allocation2 + $0xe0] sm:$0xff]
    %v52 = vld [vmem:[#allocation2 + $0xe8] sm:$0xff]
    %v53 = vld [vmem:[#allocation2 + $0xf0] sm:$0xff]
    %v54 = vld [vmem:[#allocation2 + $0xf8] sm:$0xff]
    %v55 = vld [vmem:[#allocation2 + $0x100] sm:$0xff]
    %v56 = vld [vmem:[#allocation2 + $0x108] sm:$0xff]
    %v57 = vld [vmem:[#allocation2 + $0x110] sm:$0xff]
    %v58 = vld [vmem:[#allocation2 + $0x118] sm:$0xff]
    %v59 = vld [vmem:[#allocation2 + $0x120] sm:$0xff]
    %v60 = vld [vmem:[#allocation2 + $0x128] sm:$0xff]
    %v61 = vld [vmem:[#allocation2 + $0x130] sm:$0xff]
    %v62 = vld [vmem:[#allocation2 + $0x138] sm:$0xff]
    %v63 = vld [vmem:[#allocation2 + $0x140] sm:$0xff]
    %v64 = vld [vmem:[#allocation2 + $0x148] sm:$0xff]
    %v65 = vld [vmem:[#allocation2 + $0x150] sm:$0xff]
    %v66 = vld [vmem:[#allocation2 + $0x158] sm:$0xff]
    %v67 = vld [vmem:[#allocation2 + $0x160] sm:$0xff]
    %v68 = vld [vmem:[#allocation2 + $0x168] sm:$0xff]
    %v69 = vld [vmem:[#allocation2 + $0x170] sm:$0xff]
    %v70 = vld [vmem:[#allocation2 + $0x178] sm:$0xff]
    %v71 = vld [vmem:[#allocation2 + $0x180] sm:$0xff]
    %v72 = vld [vmem:[#allocation2 + $0x188] sm:$0xff]
    %v73 = vld [vmem:[#allocation2 + $0x190] sm:$0xff]
    %v74 = vld [vmem:[#allocation2 + $0x198] sm:$0xff]
    %v75 = vld [vmem:[#allocation2 + $0x1a0] sm:$0xff]
    %v76 = vld [vmem:[#allocation2 + $0x1a8] sm:$0xff]
    %v77 = vld [vmem:[#allocation2 + $0x1b0] sm:$0xff]
    %v78 = vld [vmem:[#allocation2 + $0x1b8] sm:$0xff]
    %v79 = vld [vmem:[#allocation2 + $0x1c0] sm:$0xff]
    %v80 = vld [vmem:[#allocation2 + $0x1c8] sm:$0xff]
    %v81 = vld [vmem:[#allocation2 + $0x1d0] sm:$0xff]
    %v82 = vld [vmem:[#allocation2 + $0x1d8] sm:$0xff]
    %v83 = vld [vmem:[#allocation2 + $0x1e0] sm:$0xff]
    %v84 = vld [vmem:[#allocation2 + $0x1e8] sm:$0xff]
    %v85 = vld [vmem:[#allocation2 + $0x1f0] sm:$0xff]
    %v86 = vld [vmem:[#allocation2 + $0x1f8] sm:$0xff]
    %v87 = vld [vmem:[#allocation2 + $0x200] sm:$0xff]
    %v88 = vld [vmem:[#allocation2 + $0x208] sm:$0xff]
    %v89 = vld [vmem:[#allocation2 + $0x210] sm:$0xff]
    %v90 = vld [vmem:[#allocation2 + $0x218] sm:$0xff]
    %v91 = vld [vmem:[#allocation2 + $0x220] sm:$0xff]
    %v92 = vld [vmem:[#allocation2 + $0x228] sm:$0xff]
    %v93 = vld [vmem:[#allocation2 + $0x230] sm:$0xff]
    %v94 = vld [vmem:[#allocation2 + $0x238] sm:$0xff]
    %v95 = vld [vmem:[#allocation2 + $0x240] sm:$0xff]
    %v96 = vld [vmem:[#allocation2 + $0x248] sm:$0xff]
    %v97 = vld [vmem:[#allocation2 + $0x250] sm:$0xff]
    %v98 = vld [vmem:[#allocation2 + $0x258] sm:$0xff]
    %v99 = vld [vmem:[#allocation2 + $0x260] sm:$0xff]
    %v100 = vld [vmem:[#allocation2 + $0x268] sm:$0xff]
    %v101 = vld [vmem:[#allocation2 + $0x270] sm:$0xff]
    %v102 = vld [vmem:[#allocation2 + $0x278] sm:$0xff]
    %v103 = vld [vmem:[#allocation2 + $0x280] sm:$0xff]
    %v104 = vld [vmem:[#allocation2 + $0x288] sm:$0xff]
    %v105 = vld [vmem:[#allocation2 + $0x290] sm:$0xff]
    %v106 = vld [vmem:[#allocation2 + $0x298] sm:$0xff]
    %v107 = vld [vmem:[#allocation2 + $0x2a0] sm:$0xff]
    %v108 = vld [vmem:[#allocation2 + $0x2a8] sm:$0xff]
    %v109 = vld [vmem:[#allocation2 + $0x2b0] sm:$0xff]
    %v110 = vld [vmem:[#allocation2 + $0x2b8] sm:$0xff]
    %v111 = vld [vmem:[#allocation2 + $0x2c0] sm:$0xff]
    %v112 = vld [vmem:[#allocation2 + $0x2c8] sm:$0xff]
    %v113 = vld [vmem:[#allocation2 + $0x2d0] sm:$0xff]
    %v114 = vld [vmem:[#allocation2 + $0x2d8] sm:$0xff]
    %v115 = vld [vmem:[#allocation2 + $0x2e0] sm:$0xff]
    %v116 = vld [vmem:[#allocation2 + $0x2e8] sm:$0xff]
    %v117 = vld [vmem:[#allocation2 + $0x2f0] sm:$0xff]
    %v118 = vld [vmem:[#allocation2 + $0x2f8] sm:$0xff]
    %v119 = vld [vmem:[#allocation2 + $0x300] sm:$0xff]
    %v120 = vld [vmem:[#allocation2 + $0x308] sm:$0xff]
    %v121 = vld [vmem:[#allocation2 + $0x310] sm:$0xff]
    %v122 = vld [vmem:[#allocation2 + $0x318] sm:$0xff]
    %v123 = vld [vmem:[#allocation2 + $0x320] sm:$0xff]
    %v124 = vld [vmem:[#allocation2 + $0x328] sm:$0xff]
    %v125 = vld [vmem:[#allocation2 + $0x330] sm:$0xff]
    %v126 = vld [vmem:[#allocation2 + $0x338] sm:$0xff]
    %v127 = vld [vmem:[#allocation2 + $0x340] sm:$0xff]
    %v128 = vld [vmem:[#allocation2 + $0x348] sm:$0xff]
    %v129 = vld [vmem:[#allocation2 + $0x350] sm:$0xff]
    %v130 = vld [vmem:[#allocation2 + $0x358] sm:$0xff]
    %v131 = vld [vmem:[#allocation2 + $0x360] sm:$0xff]
    %v132 = vld [vmem:[#allocation2 + $0x368] sm:$0xff]
    %v133 = vld [vmem:[#allocation2 + $0x370] sm:$0xff]
    %v134 = vld [vmem:[#allocation2 + $0x378] sm:$0xff]
    %v135 = vld [vmem:[#allocation2 + $0x380] sm:$0xff]
    %v136 = vld [vmem:[#allocation2 + $0x388] sm:$0xff]
    %v137 = vld [vmem:[#allocation2 + $0x390] sm:$0xff]
    %v138 = vld [vmem:[#allocation2 + $0x398] sm:$0xff]
    %v139 = vld [vmem:[#allocation2 + $0x3a0] sm:$0xff]
    %v140 = vld [vmem:[#allocation2 + $0x3a8] sm:$0xff]
    %v141 = vld [vmem:[#allocation2 + $0x3b0] sm:$0xff]
    %v142 = vld [vmem:[#allocation2 + $0x3b8] sm:$0xff]
    %v143 = vld [vmem:[#allocation2 + $0x3c0] sm:$0xff]
    %v144 = vld [vmem:[#allocation2 + $0x3c8] sm:$0xff]
    %v145 = vld [vmem:[#allocation2 + $0x3d0] sm:$0xff]
    %v146 = vld [vmem:[#allocation2 + $0x3d8] sm:$0xff]
    %v147 = vld [vmem:[#allocation2 + $0x3e0] sm:$0xff]
    %v148 = vld [vmem:[#allocation2 + $0x3e8] sm:$0xff]
    %v149 = vld [vmem:[#allocation2 + $0x3f0] sm:$0xff]
    %v150 = vld [vmem:[#allocation2 + $0x3f8] sm:$0xff]
    %v151 = vld [vmem:[#allocation2 + $0x400] sm:$0xff]
    %v152 = vld [vmem:[#allocation2 + $0x408] sm:$0xff]
    %v153 = vld [vmem:[#allocation2 + $0x410] sm:$0xff]
    %v154 = vld [vmem:[#allocation2 + $0x418] sm:$0xff]
    %v155 = vld [vmem:[#allocation2 + $0x420] sm:$0xff]
    %v156 = vld [vmem:[#allocation2 + $0x428] sm:$0xff]
    %v157 = vld [vmem:[#allocation2 + $0x430] sm:$0xff]
    %v158 = vld [vmem:[#allocation2 + $0x438] sm:$0xff]
    %v159 = vld [vmem:[#allocation2 + $0x440] sm:$0xff]
    %v160 = vld [vmem:[#allocation2 + $0x448] sm:$0xff]
    %v161 = vld [vmem:[#allocation2 + $0x450] sm:$0xff]
    %v162 = vld [vmem:[#allocation2 + $0x458] sm:$0xff]
    %v163 = vld [vmem:[#allocation2 + $0x460] sm:$0xff]
    %v164 = vld [vmem:[#allocation2 + $0x468] sm:$0xff]
    %v165 = vld [vmem:[#allocation2 + $0x470] sm:$0xff]
    %v166 = vld [vmem:[#allocation2 + $0x478] sm:$0xff]
    %v167 = vld [vmem:[#allocation2 + $0x480] sm:$0xff]
    %v168 = vld [vmem:[#allocation2 + $0x488] sm:$0xff]
    %v169 = vld [vmem:[#allocation2 + $0x490] sm:$0xff]
    %v170 = vld [vmem:[#allocation2 + $0x498] sm:$0xff]
    %v171 = vld [vmem:[#allocation2 + $0x4a0] sm:$0xff]
    %v172 = vld [vmem:[#allocation2 + $0x4a8] sm:$0xff]
    %v173 = vld [vmem:[#allocation2 + $0x4b0] sm:$0xff]
    %v174 = vld [vmem:[#allocation2 + $0x4b8] sm:$0xff]
    %v175 = vld [vmem:[#allocation2 + $0x4c0] sm:$0xff]
    %v176 = vld [vmem:[#allocation2 + $0x4c8] sm:$0xff]
    %v177 = vld [vmem:[#allocation2 + $0x4d0] sm:$0xff]
    %v178 = vld [vmem:[#allocation2 + $0x4d8] sm:$0xff]
    %v179 = vld [vmem:[#allocation2 + $0x4e0] sm:$0xff]
    %v180 = vld [vmem:[#allocation2 + $0x4e8] sm:$0xff]
    %v181 = vld [vmem:[#allocation2 + $0x4f0] sm:$0xff]
    %v182 = vld [vmem:[#allocation2 + $0x4f8] sm:$0xff]
    %v183 = vld [vmem:[#allocation2 + $0x500] sm:$0xff]
    %v184 = vld [vmem:[#allocation2 + $0x508] sm:$0xff]
    %v185 = vld [vmem:[#allocation2 + $0x510] sm:$0xff]
    %v186 = vld [vmem:[#allocation2 + $0x518] sm:$0xff]
    %v187 = vld [vmem:[#allocation2 + $0x520] sm:$0xff]
    %v188 = vld [vmem:[#allocation2 + $0x528] sm:$0xff]
    %v189 = vld [vmem:[#allocation2 + $0x530] sm:$0xff]
    %v190 = vld [vmem:[#allocation2 + $0x538] sm:$0xff]
    %v191 = vld [vmem:[#allocation2 + $0x540] sm:$0xff]
    %v192 = vld [vmem:[#allocation2 + $0x548] sm:$0xff]
    %v193 = vld [vmem:[#allocation2 + $0x550] sm:$0xff]
    %v194 = vld [vmem:[#allocation2 + $0x558] sm:$0xff]
    %v195 = vld [vmem:[#allocation2 + $0x560] sm:$0xff]
    %v196 = vld [vmem:[#allocation2 + $0x568] sm:$0xff]
    %v197 = vld [vmem:[#allocation2 + $0x570] sm:$0xff]
    %v198 = vld [vmem:[#allocation2 + $0x578] sm:$0xff]
    %v199 = vld [vmem:[#allocation2 + $0x580] sm:$0xff]
    %v200 = vld [vmem:[#allocation2 + $0x588] sm:$0xff]
    %v201 = vld [vmem:[#allocation2 + $0x590] sm:$0xff]
    %v202 = vld [vmem:[#allocation2 + $0x598] sm:$0xff]
    %v203 = vld [vmem:[#allocation2 + $0x5a0] sm:$0xff]
    %v204 = vld [vmem:[#allocation2 + $0x5a8] sm:$0xff]
    %v205 = vld [vmem:[#allocation2 + $0x5b0] sm:$0xff]
    %v206 = vld [vmem:[#allocation2 + $0x5b8] sm:$0xff]
    %v207 = vld [vmem:[#allocation2 + $0x5c0] sm:$0xff]
    %v208 = vld [vmem:[#allocation2 + $0x5c8] sm:$0xff]
    %v209 = vld [vmem:[#allocation2 + $0x5d0] sm:$0xff]
    %v210 = vld [vmem:[#allocation2 + $0x5d8] sm:$0xff]
    %v211 = vld [vmem:[#allocation2 + $0x5e0] sm:$0xff]
    %v212 = vld [vmem:[#allocation2 + $0x5e8] sm:$0xff]
    %v213 = vld [vmem:[#allocation2 + $0x5f0] sm:$0xff]
    %v214 = vld [vmem:[#allocation2 + $0x5f8] sm:$0xff]
    %v215 = vld [vmem:[#allocation2 + $0x600] sm:$0xff]
    %v216 = vld [vmem:[#allocation2 + $0x608] sm:$0xff]
    %v217 = vld [vmem:[#allocation2 + $0x610] sm:$0xff]
    %v218 = vld [vmem:[#allocation2 + $0x618] sm:$0xff]
    %v219 = vld [vmem:[#allocation2 + $0x620] sm:$0xff]
    %v220 = vld [vmem:[#allocation2 + $0x628] sm:$0xff]
    %v221 = vld [vmem:[#allocation2 + $0x630] sm:$0xff]
    %v222 = vld [vmem:[#allocation2 + $0x638] sm:$0xff]
    %v223 = vld [vmem:[#allocation2 + $0x640] sm:$0xff]
    %v224 = vld [vmem:[#allocation2 + $0x648] sm:$0xff]
    %v225 = vld [vmem:[#allocation2 + $0x650] sm:$0xff]
    %v226 = vld [vmem:[#allocation2 + $0x658] sm:$0xff]
    %v227 = vld [vmem:[#allocation2 + $0x660] sm:$0xff]
    %v228 = vld [vmem:[#allocation2 + $0x668] sm:$0xff]
    %v229 = vld [vmem:[#allocation2 + $0x670] sm:$0xff]
    %v230 = vld [vmem:[#allocation2 + $0x678] sm:$0xff]
    %v231 = vld [vmem:[#allocation2 + $0x680] sm:$0xff]
    %v232 = vld [vmem:[#allocation2 + $0x688] sm:$0xff]
    %v233 = vld [vmem:[#allocation2 + $0x690] sm:$0xff]
    %v234 = vld [vmem:[#allocation2 + $0x698] sm:$0xff]
    %v235 = vld [vmem:[#allocation2 + $0x6a0] sm:$0xff]
    %v236 = vld [vmem:[#allocation2 + $0x6a8] sm:$0xff]
    %v237 = vld [vmem:[#allocation2 + $0x6b0] sm:$0xff]
    %v238 = vld [vmem:[#allocation2 + $0x6b8] sm:$0xff]
    %v239 = vld [vmem:[#allocation2 + $0x6c0] sm:$0xff]
    %v240 = vld [vmem:[#allocation2 + $0x6c8] sm:$0xff]
    %v241 = vld [vmem:[#allocation2 + $0x6d0] sm:$0xff]
    %v242 = vld [vmem:[#allocation2 + $0x6d8] sm:$0xff]
    %v243 = vld [vmem:[#allocation2 + $0x6e0] sm:$0xff]
    %v244 = vld [vmem:[#allocation2 + $0x6e8] sm:$0xff]
    %v245 = vld [vmem:[#allocation2 + $0x6f0] sm:$0xff]
    %v246 = vld [vmem:[#allocation2 + $0x6f8] sm:$0xff]
    %v247 = vld [vmem:[#allocation2 + $0x700] sm:$0xff]
    %v248 = vld [vmem:[#allocation2 + $0x708] sm:$0xff]
    %v249 = vld [vmem:[#allocation2 + $0x710] sm:$0xff]
    %v250 = vld [vmem:[#allocation2 + $0x718] sm:$0xff]
    %v251 = vld [vmem:[#allocation2 + $0x720] sm:$0xff]
    %v252 = vld [vmem:[#allocation2 + $0x728] sm:$0xff]
    %v253 = vld [vmem:[#allocation2 + $0x730] sm:$0xff]
    %v254 = vld [vmem:[#allocation2 + $0x738] sm:$0xff]
    %v255 = vld [vmem:[#allocation2 + $0x740] sm:$0xff]
    %v256 = vld [vmem:[#allocation2 + $0x748] sm:$0xff]
    %v257 = vld [vmem:[#allocation2 + $0x750] sm:$0xff]
    %v258 = vld [vmem:[#allocation2 + $0x758] sm:$0xff]
    %v259 = vld [vmem:[#allocation2 + $0x760] sm:$0xff]
    %v260 = vld [vmem:[#allocation2 + $0x768] sm:$0xff]
    %v261 = vld [vmem:[#allocation2 + $0x770] sm:$0xff]
    %v262 = vld [vmem:[#allocation2 + $0x778] sm:$0xff]
    %v263 = vld [vmem:[#allocation2 + $0x780] sm:$0xff]
    %v264 = vld [vmem:[#allocation2 + $0x788] sm:$0xff]
    %v265 = vld [vmem:[#allocation2 + $0x790] sm:$0xff]
    %v266 = vld [vmem:[#allocation2 + $0x798] sm:$0xff]
    %v267 = vld [vmem:[#allocation2 + $0x7a0] sm:$0xff]
    %v268 = vld [vmem:[#allocation2 + $0x7a8] sm:$0xff]
    %v269 = vld [vmem:[#allocation2 + $0x7b0] sm:$0xff]
    %v270 = vld [vmem:[#allocation2 + $0x7b8] sm:$0xff]
    %v271 = vld [vmem:[#allocation2 + $0x7c0] sm:$0xff]
    %v272 = vld [vmem:[#allocation2 + $0x7c8] sm:$0xff]
    %v273 = vld [vmem:[#allocation2 + $0x7d0] sm:$0xff]
    %v274 = vld [vmem:[#allocation2 + $0x7d8] sm:$0xff]
    %v275 = vld [vmem:[#allocation2 + $0x7e0] sm:$0xff]
    %v276 = vld [vmem:[#allocation2 + $0x7e8] sm:$0xff]
    %v277 = vld [vmem:[#allocation2 + $0x7f0] sm:$0xff]
    %v278 = vld [vmem:[#allocation2 + $0x7f8] sm:$0xff]
    %v279 = vld [vmem:[#allocation2 + $0x800] sm:$0xff]
    %v280 = vld [vmem:[#allocation2 + $0x808] sm:$0xff]
    %v281 = vld [vmem:[#allocation2 + $0x810] sm:$0xff]
    %v282 = vld [vmem:[#allocation2 + $0x818] sm:$0xff]
    %v283 = vld [vmem:[#allocation2 + $0x820] sm:$0xff]
    %v284 = vld [vmem:[#allocation2 + $0x828] sm:$0xff]
    %v285 = vld [vmem:[#allocation2 + $0x830] sm:$0xff]
    %v286 = vld [vmem:[#allocation2 + $0x838] sm:$0xff]
    %v287 = vld [vmem:[#allocation2 + $0x840] sm:$0xff]
    %v288 = vld [vmem:[#allocation2 + $0x848] sm:$0xff]
    %v289 = vld [vmem:[#allocation2 + $0x850] sm:$0xff]
    %v290 = vld [vmem:[#allocation2 + $0x858] sm:$0xff]
    %v291 = vld [vmem:[#allocation2 + $0x860] sm:$0xff]
    %v292 = vld [vmem:[#allocation2 + $0x868] sm:$0xff]
    %v293 = vld [vmem:[#allocation2 + $0x870] sm:$0xff]
    %v294 = vld [vmem:[#allocation2 + $0x878] sm:$0xff]
    %v295 = vld [vmem:[#allocation2 + $0x880] sm:$0xff]
    %v296 = vld [vmem:[#allocation2 + $0x888] sm:$0xff]
    %v297 = vld [vmem:[#allocation2 + $0x890] sm:$0xff]
    %v298 = vld [vmem:[#allocation2 + $0x898] sm:$0xff]
    %v299 = vld [vmem:[#allocation2 + $0x8a0] sm:$0xff]
    %v300 = vld [vmem:[#allocation2 + $0x8a8] sm:$0xff]
    %v301 = vld [vmem:[#allocation2 + $0x8b0] sm:$0xff]
    %v302 = vld [vmem:[#allocation2 + $0x8b8] sm:$0xff]
    %v303 = vld [vmem:[#allocation2 + $0x8c0] sm:$0xff]
    %v304 = vld [vmem:[#allocation2 + $0x8c8] sm:$0xff]
    %v305 = vld [vmem:[#allocation2 + $0x8d0] sm:$0xff]
    %v306 = vld [vmem:[#allocation2 + $0x8d8] sm:$0xff]
    %v307 = vld [vmem:[#allocation2 + $0x8e0] sm:$0xff]
    %v308 = vld [vmem:[#allocation2 + $0x8e8] sm:$0xff]
    %v309 = vld [vmem:[#allocation2 + $0x8f0] sm:$0xff]
    %v310 = vld [vmem:[#allocation2 + $0x8f8] sm:$0xff]
    %v311 = vld [vmem:[#allocation2 + $0x900] sm:$0xff]
    %v312 = vld [vmem:[#allocation2 + $0x908] sm:$0xff]
    %v313 = vld [vmem:[#allocation2 + $0x910] sm:$0xff]
    %v314 = vld [vmem:[#allocation2 + $0x918] sm:$0xff]
    %v315 = vld [vmem:[#allocation2 + $0x920] sm:$0xff]
    %v316 = vld [vmem:[#allocation2 + $0x928] sm:$0xff]
    %v317 = vld [vmem:[#allocation2 + $0x930] sm:$0xff]
    %v318 = vld [vmem:[#allocation2 + $0x938] sm:$0xff]
    %v319 = vld [vmem:[#allocation2 + $0x940] sm:$0xff]
    %v320 = vld [vmem:[#allocation2 + $0x948] sm:$0xff]
    %v321 = vld [vmem:[#allocation2 + $0x950] sm:$0xff]
    %v322 = vld [vmem:[#allocation2 + $0x958] sm:$0xff]
    %v323 = vld [vmem:[#allocation2 + $0x960] sm:$0xff]
    %v324 = vld [vmem:[#allocation2 + $0x968] sm:$0xff]
    %v325 = vld [vmem:[#allocation2 + $0x970] sm:$0xff]
    %v326 = vld [vmem:[#allocation2 + $0x978] sm:$0xff]
    %v327 = vld [vmem:[#allocation2 + $0x980] sm:$0xff]
    %v328 = vld [vmem:[#allocation2 + $0x988] sm:$0xff]
    %v329 = vld [vmem:[#allocation2 + $0x990] sm:$0xff]
    %v330 = vld [vmem:[#allocation2 + $0x998] sm:$0xff]
    %v331 = vld [vmem:[#allocation2 + $0x9a0] sm:$0xff]
    %v332 = vld [vmem:[#allocation2 + $0x9a8] sm:$0xff]
    %v333 = vld [vmem:[#allocation2 + $0x9b0] sm:$0xff]
    %v334 = vld [vmem:[#allocation2 + $0x9b8] sm:$0xff]
    %v335 = vld [vmem:[#allocation2 + $0x9c0] sm:$0xff]
    %v336 = vld [vmem:[#allocation2 + $0x9c8] sm:$0xff]
    %v337 = vld [vmem:[#allocation2 + $0x9d0] sm:$0xff]
    %v338 = vld [vmem:[#allocation2 + $0x9d8] sm:$0xff]
    %v339 = vld [vmem:[#allocation2 + $0x9e0] sm:$0xff]
    %v340 = vld [vmem:[#allocation2 + $0x9e8] sm:$0xff]
    %v341 = vld [vmem:[#allocation2 + $0x9f0] sm:$0xff]
    %v342 = vld [vmem:[#allocation2 + $0x9f8] sm:$0xff]
    %v343 = vld [vmem:[#allocation2 + $0xa00] sm:$0xff]
    %v344 = vld [vmem:[#allocation2 + $0xa08] sm:$0xff]
    %v345 = vld [vmem:[#allocation2 + $0xa10] sm:$0xff]
    %v346 = vld [vmem:[#allocation2 + $0xa18] sm:$0xff]
    %v347 = vld [vmem:[#allocation2 + $0xa20] sm:$0xff]
    %v348 = vld [vmem:[#allocation2 + $0xa28] sm:$0xff]
    %v349 = vld [vmem:[#allocation2 + $0xa30] sm:$0xff]
    %v350 = vld [vmem:[#allocation2 + $0xa38] sm:$0xff]
    %v351 = vld [vmem:[#allocation2 + $0xa40] sm:$0xff]
    %v352 = vld [vmem:[#allocation2 + $0xa48] sm:$0xff]
    %v353 = vld [vmem:[#allocation2 + $0xa50] sm:$0xff]
    %v354 = vld [vmem:[#allocation2 + $0xa58] sm:$0xff]
    %v355 = vld [vmem:[#allocation2 + $0xa60] sm:$0xff]
    %v356 = vld [vmem:[#allocation2 + $0xa68] sm:$0xff]
    %v357 = vld [vmem:[#allocation2 + $0xa70] sm:$0xff]
    %v358 = vld [vmem:[#allocation2 + $0xa78] sm:$0xff]
    %v359 = vld [vmem:[#allocation2 + $0xa80] sm:$0xff]
    %v360 = vld [vmem:[#allocation2 + $0xa88] sm:$0xff]
    %v361 = vld [vmem:[#allocation2 + $0xa90] sm:$0xff]
    %v362 = vld [vmem:[#allocation2 + $0xa98] sm:$0xff]
    %v363 = vld [vmem:[#allocation2 + $0xaa0] sm:$0xff]
    %v364 = vld [vmem:[#allocation2 + $0xaa8] sm:$0xff]
    %v365 = vld [vmem:[#allocation2 + $0xab0] sm:$0xff]
    %v366 = vld [vmem:[#allocation2 + $0xab8] sm:$0xff]
    %v367 = vld [vmem:[#allocation2 + $0xac0] sm:$0xff]
    %v368 = vld [vmem:[#allocation2 + $0xac8] sm:$0xff]
    %v369 = vld [vmem:[#allocation2 + $0xad0] sm:$0xff]
    %v370 = vld [vmem:[#allocation2 + $0xad8] sm:$0xff]
    %v371 = vld [vmem:[#allocation2 + $0xae0] sm:$0xff]
    %v372 = vld [vmem:[#allocation2 + $0xae8] sm:$0xff]
    %v373 = vld [vmem:[#allocation2 + $0xaf0] sm:$0xff]
    %v374 = vld [vmem:[#allocation2 + $0xaf8] sm:$0xff]
    %v375 = vld [vmem:[#allocation2 + $0xb00] sm:$0xff]
    %v376 = vld [vmem:[#allocation2 + $0xb08] sm:$0xff]
    %v377 = vld [vmem:[#allocation2 + $0xb10] sm:$0xff]
    %v378 = vld [vmem:[#allocation2 + $0xb18] sm:$0xff]
    %v379 = vld [vmem:[#allocation2 + $0xb20] sm:$0xff]
    %v380 = vld [vmem:[#allocation2 + $0xb28] sm:$0xff]
    %v381 = vld [vmem:[#allocation2 + $0xb30] sm:$0xff]
    %v382 = vld [vmem:[#allocation2 + $0xb38] sm:$0xff]
    %v383 = vld [vmem:[#allocation2 + $0xb40] sm:$0xff]
    %v384 = vld [vmem:[#allocation2 + $0xb48] sm:$0xff]
    %v385 = vld [vmem:[#allocation2 + $0xb50] sm:$0xff]
    %v386 = vld [vmem:[#allocation2 + $0xb58] sm:$0xff]
    %v387 = vld [vmem:[#allocation2 + $0xb60] sm:$0xff]
    %v388 = vld [vmem:[#allocation2 + $0xb68] sm:$0xff]
    %v389 = vld [vmem:[#allocation2 + $0xb70] sm:$0xff]
    %v390 = vld [vmem:[#allocation2 + $0xb78] sm:$0xff]
    %v391 = vld [vmem:[#allocation2 + $0xb80] sm:$0xff]
    %v392 = vld [vmem:[#allocation2 + $0xb88] sm:$0xff]
    %v393 = vld [vmem:[#allocation2 + $0xb90] sm:$0xff]
    %v394 = vld [vmem:[#allocation2 + $0xb98] sm:$0xff]
    %v395 = vld [vmem:[#allocation2 + $0xba0] sm:$0xff]
    %v396 = vld [vmem:[#allocation2 + $0xba8] sm:$0xff]
    %v397 = vld [vmem:[#allocation2 + $0xbb0] sm:$0xff]
    %v398 = vld [vmem:[#allocation2 + $0xbb8] sm:$0xff]
    %v399 = vld [vmem:[#allocation2 + $0xbc0] sm:$0xff]
    %v400 = vld [vmem:[#allocation2 + $0xbc8] sm:$0xff]
    %v401 = vld [vmem:[#allocation2 + $0xbd0] sm:$0xff]
    %v402 = vld [vmem:[#allocation2 + $0xbd8] sm:$0xff]
    %v403 = vld [vmem:[#allocation2 + $0xbe0] sm:$0xff]
    %v404 = vld [vmem:[#allocation2 + $0xbe8] sm:$0xff]
    %v405 = vld [vmem:[#allocation2 + $0xbf0] sm:$0xff]
    %v406 = vld [vmem:[#allocation2 + $0xbf8] sm:$0xff]
    %v407 = vld [vmem:[#allocation2 + $0xc00] sm:$0xff]
    %v408 = vld [vmem:[#allocation2 + $0xc08] sm:$0xff]
    %v409 = vld [vmem:[#allocation2 + $0xc10] sm:$0xff]
    %v410 = vld [vmem:[#allocation2 + $0xc18] sm:$0xff]
    %v411 = vld [vmem:[#allocation2 + $0xc20] sm:$0xff]
    %v412 = vld [vmem:[#allocation2 + $0xc28] sm:$0xff]
    %v413 = vld [vmem:[#allocation2 + $0xc30] sm:$0xff]
    %v414 = vld [vmem:[#allocation2 + $0xc38] sm:$0xff]
    %v415 = vld [vmem:[#allocation2 + $0xc40] sm:$0xff]
    %v416 = vld [vmem:[#allocation2 + $0xc48] sm:$0xff]
    %v417 = vld [vmem:[#allocation2 + $0xc50] sm:$0xff]
    %v418 = vld [vmem:[#allocation2 + $0xc58] sm:$0xff]
    %v419 = vld [vmem:[#allocation2 + $0xc60] sm:$0xff]
    %v420 = vld [vmem:[#allocation2 + $0xc68] sm:$0xff]
    %v421 = vld [vmem:[#allocation2 + $0xc70] sm:$0xff]
    %v422 = vld [vmem:[#allocation2 + $0xc78] sm:$0xff]
    %v423 = vld [vmem:[#allocation2 + $0xc80] sm:$0xff]
    %v424 = vld [vmem:[#allocation2 + $0xc88] sm:$0xff]
    %v425 = vld [vmem:[#allocation2 + $0xc90] sm:$0xff]
    %v426 = vld [vmem:[#allocation2 + $0xc98] sm:$0xff]
    %v427 = vld [vmem:[#allocation2 + $0xca0] sm:$0xff]
    %v428 = vld [vmem:[#allocation2 + $0xca8] sm:$0xff]
    %v429 = vld [vmem:[#allocation2 + $0xcb0] sm:$0xff]
    %v430 = vld [vmem:[#allocation2 + $0xcb8] sm:$0xff]
    %v431 = vld [vmem:[#allocation2 + $0xcc0] sm:$0xff]
    %v432 = vld [vmem:[#allocation2 + $0xcc8] sm:$0xff]
    %v433 = vld [vmem:[#allocation2 + $0xcd0] sm:$0xff]
    %v434 = vld [vmem:[#allocation2 + $0xcd8] sm:$0xff]
    %v435 = vld [vmem:[#allocation2 + $0xce0] sm:$0xff]
    %v436 = vld [vmem:[#allocation2 + $0xce8] sm:$0xff]
    %v437 = vld [vmem:[#allocation2 + $0xcf0] sm:$0xff]
    %v438 = vld [vmem:[#allocation2 + $0xcf8] sm:$0xff]
    %v439 = vld [vmem:[#allocation2 + $0xd00] sm:$0xff]
    %v440 = vld [vmem:[#allocation2 + $0xd08] sm:$0xff]
    %v441 = vld [vmem:[#allocation2 + $0xd10] sm:$0xff]
    %v442 = vld [vmem:[#allocation2 + $0xd18] sm:$0xff]
    %v443 = vld [vmem:[#allocation2 + $0xd20] sm:$0xff]
    %v444 = vld [vmem:[#allocation2 + $0xd28] sm:$0xff]
    %v445 = vld [vmem:[#allocation2 + $0xd30] sm:$0xff]
    %v446 = vld [vmem:[#allocation2 + $0xd38] sm:$0xff]
    %v447 = vld [vmem:[#allocation2 + $0xd40] sm:$0xff]
    %v448 = vld [vmem:[#allocation2 + $0xd48] sm:$0xff]
    %v449 = vld [vmem:[#allocation2 + $0xd50] sm:$0xff]
    %v450 = vld [vmem:[#allocation2 + $0xd58] sm:$0xff]
    %v451 = vld [vmem:[#allocation2 + $0xd60] sm:$0xff]
    %v452 = vld [vmem:[#allocation2 + $0xd68] sm:$0xff]
    %v453 = vld [vmem:[#allocation2 + $0xd70] sm:$0xff]
    %v454 = vld [vmem:[#allocation2 + $0xd78] sm:$0xff]
    %v455 = vld [vmem:[#allocation2 + $0xd80] sm:$0xff]
    %v456 = vld [vmem:[#allocation2 + $0xd88] sm:$0xff]
    %v457 = vld [vmem:[#allocation2 + $0xd90] sm:$0xff]
    %v458 = vld [vmem:[#allocation2 + $0xd98] sm:$0xff]
    %v459 = vld [vmem:[#allocation2 + $0xda0] sm:$0xff]
    %v460 = vld [vmem:[#allocation2 + $0xda8] sm:$0xff]
    %v461 = vld [vmem:[#allocation2 + $0xdb0] sm:$0xff]
    %v462 = vld [vmem:[#allocation2 + $0xdb8] sm:$0xff]
    %v463 = vld [vmem:[#allocation2 + $0xdc0] sm:$0xff]
    %v464 = vld [vmem:[#allocation2 + $0xdc8] sm:$0xff]
    %v465 = vld [vmem:[#allocation2 + $0xdd0] sm:$0xff]
    %v466 = vld [vmem:[#allocation2 + $0xdd8] sm:$0xff]
    %v467 = vld [vmem:[#allocation2 + $0xde0] sm:$0xff]
    %v468 = vld [vmem:[#allocation2 + $0xde8] sm:$0xff]
    %v469 = vld [vmem:[#allocation2 + $0xdf0] sm:$0xff]
    %v470 = vld [vmem:[#allocation2 + $0xdf8] sm:$0xff]
    %v471 = vld [vmem:[#allocation2 + $0xe00] sm:$0xff]
    %v472 = vld [vmem:[#allocation2 + $0xe08] sm:$0xff]
    %v473 = vld [vmem:[#allocation2 + $0xe10] sm:$0xff]
    %v474 = vld [vmem:[#allocation2 + $0xe18] sm:$0xff]
    %v475 = vld [vmem:[#allocation2 + $0xe20] sm:$0xff]
    %v476 = vld [vmem:[#allocation2 + $0xe28] sm:$0xff]
    %v477 = vld [vmem:[#allocation2 + $0xe30] sm:$0xff]
    %v478 = vld [vmem:[#allocation2 + $0xe38] sm:$0xff]
    %v479 = vld [vmem:[#allocation2 + $0xe40] sm:$0xff]
    %v480 = vld [vmem:[#allocation2 + $0xe48] sm:$0xff]
    %v481 = vld [vmem:[#allocation2 + $0xe50] sm:$0xff]
    %v482 = vld [vmem:[#allocation2 + $0xe58] sm:$0xff]
    %v483 = vld [vmem:[#allocation2 + $0xe60] sm:$0xff]
    %v484 = vld [vmem:[#allocation2 + $0xe68] sm:$0xff]
    %v485 = vld [vmem:[#allocation2 + $0xe70] sm:$0xff]
    %v486 = vld [vmem:[#allocation2 + $0xe78] sm:$0xff]
    %v487 = vld [vmem:[#allocation2 + $0xe80] sm:$0xff]
    %v488 = vld [vmem:[#allocation2 + $0xe88] sm:$0xff]
    %v489 = vld [vmem:[#allocation2 + $0xe90] sm:$0xff]
    %v490 = vld [vmem:[#allocation2 + $0xe98] sm:$0xff]
    %v491 = vld [vmem:[#allocation2 + $0xea0] sm:$0xff]
    %v492 = vld [vmem:[#allocation2 + $0xea8] sm:$0xff]
    %v493 = vld [vmem:[#allocation2 + $0xeb0] sm:$0xff]
    %v494 = vld [vmem:[#allocation2 + $0xeb8] sm:$0xff]
    %v495 = vld [vmem:[#allocation2 + $0xec0] sm:$0xff]
    %v496 = vld [vmem:[#allocation2 + $0xec8] sm:$0xff]
    %v497 = vld [vmem:[#allocation2 + $0xed0] sm:$0xff]
    %v498 = vld [vmem:[#allocation2 + $0xed8] sm:$0xff]
    %v499 = vld [vmem:[#allocation2 + $0xee0] sm:$0xff]
    %v500 = vld [vmem:[#allocation2 + $0xee8] sm:$0xff]
    %v501 = vld [vmem:[#allocation2 + $0xef0] sm:$0xff]
    %v502 = vld [vmem:[#allocation2 + $0xef8] sm:$0xff]
    %v503 = vld [vmem:[#allocation2 + $0xf00] sm:$0xff]
    %v504 = vld [vmem:[#allocation2 + $0xf08] sm:$0xff]
    %v505 = vld [vmem:[#allocation2 + $0xf10] sm:$0xff]
    %v506 = vld [vmem:[#allocation2 + $0xf18] sm:$0xff]
    %v507 = vld [vmem:[#allocation2 + $0xf20] sm:$0xff]
    %v508 = vld [vmem:[#allocation2 + $0xf28] sm:$0xff]
    %v509 = vld [vmem:[#allocation2 + $0xf30] sm:$0xff]
    %v510 = vld [vmem:[#allocation2 + $0xf38] sm:$0xff]
    %v511 = vld [vmem:[#allocation2 + $0xf40] sm:$0xff]
    %v512 = vld [vmem:[#allocation2 + $0xf48] sm:$0xff]
    %v513 = vld [vmem:[#allocation2 + $0xf50] sm:$0xff]
    %v514 = vld [vmem:[#allocation2 + $0xf58] sm:$0xff]
    %v515 = vld [vmem:[#allocation2 + $0xf60] sm:$0xff]
    %v516 = vld [vmem:[#allocation2 + $0xf68] sm:$0xff]
    %v517 = vld [vmem:[#allocation2 + $0xf70] sm:$0xff]
    %v518 = vld [vmem:[#allocation2 + $0xf78] sm:$0xff]
    %v519 = vld [vmem:[#allocation2 + $0xf80] sm:$0xff]
    %v520 = vld [vmem:[#allocation2 + $0xf88] sm:$0xff]
    %v521 = vld [vmem:[#allocation2 + $0xf90] sm:$0xff]
    %v522 = vld [vmem:[#allocation2 + $0xf98] sm:$0xff]
    %v523 = vld [vmem:[#allocation2 + $0xfa0] sm:$0xff]
    %v524 = vld [vmem:[#allocation2 + $0xfa8] sm:$0xff]
    %v525 = vld [vmem:[#allocation2 + $0xfb0] sm:$0xff]
    %v526 = vld [vmem:[#allocation2 + $0xfb8] sm:$0xff]
    %v527 = vld [vmem:[#allocation2 + $0xfc0] sm:$0xff]
    %v528 = vld [vmem:[#allocation2 + $0xfc8] sm:$0xff]
    %v529 = vld [vmem:[#allocation2 + $0xfd0] sm:$0xff]
    %v530 = vld [vmem:[#allocation2 + $0xfd8] sm:$0xff]
    %v531 = vld [vmem:[#allocation2 + $0xfe0] sm:$0xff]
    %v532 = vld [vmem:[#allocation2 + $0xfe8] sm:$0xff]
    %v533 = vld [vmem:[#allocation2 + $0xff0] sm:$0xff]
    %v534 = vld [vmem:[#allocation2 + $0xff8] sm:$0xff]
    %v535 = vtanh.pop %v23
    %v536 = vtanh.pop %v24
    %v537 = vtanh.pop %v25
    %v538 = vtanh.pop %v26
    %v539 = vtanh.pop %v27
    %v540 = vtanh.pop %v28
    %v541 = vtanh.pop %v29
    %v542 = vtanh.pop %v30
    %v543 = vtanh.pop %v31
    %v544 = vtanh.pop %v32
    %v545 = vtanh.pop %v33
    %v546 = vtanh.pop %v34
    %v547 = vtanh.pop %v35
    %v548 = vtanh.pop %v36
    %v549 = vtanh.pop %v37
    %v550 = vtanh.pop %v38
    %v551 = vtanh.pop %v39
    %v552 = vtanh.pop %v40
    %v553 = vtanh.pop %v41
    %v554 = vtanh.pop %v42
    %v555 = vtanh.pop %v43
    %v556 = vtanh.pop %v44
    %v557 = vtanh.pop %v45
    %v558 = vtanh.pop %v46
    %v559 = vtanh.pop %v47
    %v560 = vtanh.pop %v48
    %v561 = vtanh.pop %v49
    %v562 = vtanh.pop %v50
    %v563 = vtanh.pop %v51
    %v564 = vtanh.pop %v52
    %v565 = vtanh.pop %v53
    %v566 = vtanh.pop %v54
    %v567 = vtanh.pop %v55
    %v568 = vtanh.pop %v56
    %v569 = vtanh.pop %v57
    %v570 = vtanh.pop %v58
    %v571 = vtanh.pop %v59
    %v572 = vtanh.pop %v60
    %v573 = vtanh.pop %v61
    %v574 = vtanh.pop %v62
    %v575 = vtanh.pop %v63
    %v576 = vtanh.pop %v64
    %v577 = vtanh.pop %v65
    %v578 = vtanh.pop %v66
    %v579 = vtanh.pop %v67
    %v580 = vtanh.pop %v68
    %v581 = vtanh.pop %v69
    %v582 = vtanh.pop %v70
    %v583 = vtanh.pop %v71
    %v584 = vtanh.pop %v72
    %v585 = vtanh.pop %v73
    %v586 = vtanh.pop %v74
    %v587 = vtanh.pop %v75
    %v588 = vtanh.pop %v76
    %v589 = vtanh.pop %v77
    %v590 = vtanh.pop %v78
    %v591 = vtanh.pop %v79
    %v592 = vtanh.pop %v80
    %v593 = vtanh.pop %v81
    %v594 = vtanh.pop %v82
    %v595 = vtanh.pop %v83
    %v596 = vtanh.pop %v84
    %v597 = vtanh.pop %v85
    %v598 = vtanh.pop %v86
    %v599 = vtanh.pop %v87
    %v600 = vtanh.pop %v88
    %v601 = vtanh.pop %v89
    %v602 = vtanh.pop %v90
    %v603 = vtanh.pop %v91
    %v604 = vtanh.pop %v92
    %v605 = vtanh.pop %v93
    %v606 = vtanh.pop %v94
    %v607 = vtanh.pop %v95
    %v608 = vtanh.pop %v96
    %v609 = vtanh.pop %v97
    %v610 = vtanh.pop %v98
    %v611 = vtanh.pop %v99
    %v612 = vtanh.pop %v100
    %v613 = vtanh.pop %v101
    %v614 = vtanh.pop %v102
    %v615 = vtanh.pop %v103
    %v616 = vtanh.pop %v104
    %v617 = vtanh.pop %v105
    %v618 = vtanh.pop %v106
    %v619 = vtanh.pop %v107
    %v620 = vtanh.pop %v108
    %v621 = vtanh.pop %v109
    %v622 = vtanh.pop %v110
    %v623 = vtanh.pop %v111
    %v624 = vtanh.pop %v112
    %v625 = vtanh.pop %v113
    %v626 = vtanh.pop %v114
    %v627 = vtanh.pop %v115
    %v628 = vtanh.pop %v116
    %v629 = vtanh.pop %v117
    %v630 = vtanh.pop %v118
    %v631 = vtanh.pop %v119
    %v632 = vtanh.pop %v120
    %v633 = vtanh.pop %v121
    %v634 = vtanh.pop %v122
    %v635 = vtanh.pop %v123
    %v636 = vtanh.pop %v124
    %v637 = vtanh.pop %v125
    %v638 = vtanh.pop %v126
    %v639 = vtanh.pop %v127
    %v640 = vtanh.pop %v128
    %v641 = vtanh.pop %v129
    %v642 = vtanh.pop %v130
    %v643 = vtanh.pop %v131
    %v644 = vtanh.pop %v132
    %v645 = vtanh.pop %v133
    %v646 = vtanh.pop %v134
    %v647 = vtanh.pop %v135
    %v648 = vtanh.pop %v136
    %v649 = vtanh.pop %v137
    %v650 = vtanh.pop %v138
    %v651 = vtanh.pop %v139
    %v652 = vtanh.pop %v140
    %v653 = vtanh.pop %v141
    %v654 = vtanh.pop %v142
    %v655 = vtanh.pop %v143
    %v656 = vtanh.pop %v144
    %v657 = vtanh.pop %v145
    %v658 = vtanh.pop %v146
    %v659 = vtanh.pop %v147
    %v660 = vtanh.pop %v148
    %v661 = vtanh.pop %v149
    %v662 = vtanh.pop %v150
    %v663 = vtanh.pop %v151
    %v664 = vtanh.pop %v152
    %v665 = vtanh.pop %v153
    %v666 = vtanh.pop %v154
    %v667 = vtanh.pop %v155
    %v668 = vtanh.pop %v156
    %v669 = vtanh.pop %v157
    %v670 = vtanh.pop %v158
    %v671 = vtanh.pop %v159
    %v672 = vtanh.pop %v160
    %v673 = vtanh.pop %v161
    %v674 = vtanh.pop %v162
    %v675 = vtanh.pop %v163
    %v676 = vtanh.pop %v164
    %v677 = vtanh.pop %v165
    %v678 = vtanh.pop %v166
    %v679 = vtanh.pop %v167
    %v680 = vtanh.pop %v168
    %v681 = vtanh.pop %v169
    %v682 = vtanh.pop %v170
    %v683 = vtanh.pop %v171
    %v684 = vtanh.pop %v172
    %v685 = vtanh.pop %v173
    %v686 = vtanh.pop %v174
    %v687 = vtanh.pop %v175
    %v688 = vtanh.pop %v176
    %v689 = vtanh.pop %v177
    %v690 = vtanh.pop %v178
    %v691 = vtanh.pop %v179
    %v692 = vtanh.pop %v180
    %v693 = vtanh.pop %v181
    %v694 = vtanh.pop %v182
    %v695 = vtanh.pop %v183
    %v696 = vtanh.pop %v184
    %v697 = vtanh.pop %v185
    %v698 = vtanh.pop %v186
    %v699 = vtanh.pop %v187
    %v700 = vtanh.pop %v188
    %v701 = vtanh.pop %v189
    %v702 = vtanh.pop %v190
    %v703 = vtanh.pop %v191
    %v704 = vtanh.pop %v192
    %v705 = vtanh.pop %v193
    %v706 = vtanh.pop %v194
    %v707 = vtanh.pop %v195
    %v708 = vtanh.pop %v196
    %v709 = vtanh.pop %v197
    %v710 = vtanh.pop %v198
    %v711 = vtanh.pop %v199
    %v712 = vtanh.pop %v200
    %v713 = vtanh.pop %v201
    %v714 = vtanh.pop %v202
    %v715 = vtanh.pop %v203
    %v716 = vtanh.pop %v204
    %v717 = vtanh.pop %v205
    %v718 = vtanh.pop %v206
    %v719 = vtanh.pop %v207
    %v720 = vtanh.pop %v208
    %v721 = vtanh.pop %v209
    %v722 = vtanh.pop %v210
    %v723 = vtanh.pop %v211
    %v724 = vtanh.pop %v212
    %v725 = vtanh.pop %v213
    %v726 = vtanh.pop %v214
    %v727 = vtanh.pop %v215
    %v728 = vtanh.pop %v216
    %v729 = vtanh.pop %v217
    %v730 = vtanh.pop %v218
    %v731 = vtanh.pop %v219
    %v732 = vtanh.pop %v220
    %v733 = vtanh.pop %v221
    %v734 = vtanh.pop %v222
    %v735 = vtanh.pop %v223
    %v736 = vtanh.pop %v224
    %v737 = vtanh.pop %v225
    %v738 = vtanh.pop %v226
    %v739 = vtanh.pop %v227
    %v740 = vtanh.pop %v228
    %v741 = vtanh.pop %v229
    %v742 = vtanh.pop %v230
    %v743 = vtanh.pop %v231
    %v744 = vtanh.pop %v232
    %v745 = vtanh.pop %v233
    %v746 = vtanh.pop %v234
    %v747 = vtanh.pop %v235
    %v748 = vtanh.pop %v236
    %v749 = vtanh.pop %v237
    %v750 = vtanh.pop %v238
    %v751 = vtanh.pop %v239
    %v752 = vtanh.pop %v240
    %v753 = vtanh.pop %v241
    %v754 = vtanh.pop %v242
    %v755 = vtanh.pop %v243
    %v756 = vtanh.pop %v244
    %v757 = vtanh.pop %v245
    %v758 = vtanh.pop %v246
    %v759 = vtanh.pop %v247
    %v760 = vtanh.pop %v248
    %v761 = vtanh.pop %v249
    %v762 = vtanh.pop %v250
    %v763 = vtanh.pop %v251
    %v764 = vtanh.pop %v252
    %v765 = vtanh.pop %v253
    %v766 = vtanh.pop %v254
    %v767 = vtanh.pop %v255
    %v768 = vtanh.pop %v256
    %v769 = vtanh.pop %v257
    %v770 = vtanh.pop %v258
    %v771 = vtanh.pop %v259
    %v772 = vtanh.pop %v260
    %v773 = vtanh.pop %v261
    %v774 = vtanh.pop %v262
    %v775 = vtanh.pop %v263
    %v776 = vtanh.pop %v264
    %v777 = vtanh.pop %v265
    %v778 = vtanh.pop %v266
    %v779 = vtanh.pop %v267
    %v780 = vtanh.pop %v268
    %v781 = vtanh.pop %v269
    %v782 = vtanh.pop %v270
    %v783 = vtanh.pop %v271
    %v784 = vtanh.pop %v272
    %v785 = vtanh.pop %v273
    %v786 = vtanh.pop %v274
    %v787 = vtanh.pop %v275
    %v788 = vtanh.pop %v276
    %v789 = vtanh.pop %v277
    %v790 = vtanh.pop %v278
    %v791 = vtanh.pop %v279
    %v792 = vtanh.pop %v280
    %v793 = vtanh.pop %v281
    %v794 = vtanh.pop %v282
    %v795 = vtanh.pop %v283
    %v796 = vtanh.pop %v284
    %v797 = vtanh.pop %v285
    %v798 = vtanh.pop %v286
    %v799 = vtanh.pop %v287
    %v800 = vtanh.pop %v288
    %v801 = vtanh.pop %v289
    %v802 = vtanh.pop %v290
    %v803 = vtanh.pop %v291
    %v804 = vtanh.pop %v292
    %v805 = vtanh.pop %v293
    %v806 = vtanh.pop %v294
    %v807 = vtanh.pop %v295
    %v808 = vtanh.pop %v296
    %v809 = vtanh.pop %v297
    %v810 = vtanh.pop %v298
    %v811 = vtanh.pop %v299
    %v812 = vtanh.pop %v300
    %v813 = vtanh.pop %v301
    %v814 = vtanh.pop %v302
    %v815 = vtanh.pop %v303
    %v816 = vtanh.pop %v304
    %v817 = vtanh.pop %v305
    %v818 = vtanh.pop %v306
    %v819 = vtanh.pop %v307
    %v820 = vtanh.pop %v308
    %v821 = vtanh.pop %v309
    %v822 = vtanh.pop %v310
    %v823 = vtanh.pop %v311
    %v824 = vtanh.pop %v312
    %v825 = vtanh.pop %v313
    %v826 = vtanh.pop %v314
    %v827 = vtanh.pop %v315
    %v828 = vtanh.pop %v316
    %v829 = vtanh.pop %v317
    %v830 = vtanh.pop %v318
    %v831 = vtanh.pop %v319
    %v832 = vtanh.pop %v320
    %v833 = vtanh.pop %v321
    %v834 = vtanh.pop %v322
    %v835 = vtanh.pop %v323
    %v836 = vtanh.pop %v324
    %v837 = vtanh.pop %v325
    %v838 = vtanh.pop %v326
    %v839 = vtanh.pop %v327
    %v840 = vtanh.pop %v328
    %v841 = vtanh.pop %v329
    %v842 = vtanh.pop %v330
    %v843 = vtanh.pop %v331
    %v844 = vtanh.pop %v332
    %v845 = vtanh.pop %v333
    %v846 = vtanh.pop %v334
    %v847 = vtanh.pop %v335
    %v848 = vtanh.pop %v336
    %v849 = vtanh.pop %v337
    %v850 = vtanh.pop %v338
    %v851 = vtanh.pop %v339
    %v852 = vtanh.pop %v340
    %v853 = vtanh.pop %v341
    %v854 = vtanh.pop %v342
    %v855 = vtanh.pop %v343
    %v856 = vtanh.pop %v344
    %v857 = vtanh.pop %v345
    %v858 = vtanh.pop %v346
    %v859 = vtanh.pop %v347
    %v860 = vtanh.pop %v348
    %v861 = vtanh.pop %v349
    %v862 = vtanh.pop %v350
    %v863 = vtanh.pop %v351
    %v864 = vtanh.pop %v352
    %v865 = vtanh.pop %v353
    %v866 = vtanh.pop %v354
    %v867 = vtanh.pop %v355
    %v868 = vtanh.pop %v356
    %v869 = vtanh.pop %v357
    %v870 = vtanh.pop %v358
    %v871 = vtanh.pop %v359
    %v872 = vtanh.pop %v360
    %v873 = vtanh.pop %v361
    %v874 = vtanh.pop %v362
    %v875 = vtanh.pop %v363
    %v876 = vtanh.pop %v364
    %v877 = vtanh.pop %v365
    %v878 = vtanh.pop %v366
    %v879 = vtanh.pop %v367
    %v880 = vtanh.pop %v368
    %v881 = vtanh.pop %v369
    %v882 = vtanh.pop %v370
    %v883 = vtanh.pop %v371
    %v884 = vtanh.pop %v372
    %v885 = vtanh.pop %v373
    %v886 = vtanh.pop %v374
    %v887 = vtanh.pop %v375
    %v888 = vtanh.pop %v376
    %v889 = vtanh.pop %v377
    %v890 = vtanh.pop %v378
    %v891 = vtanh.pop %v379
    %v892 = vtanh.pop %v380
    %v893 = vtanh.pop %v381
    %v894 = vtanh.pop %v382
    %v895 = vtanh.pop %v383
    %v896 = vtanh.pop %v384
    %v897 = vtanh.pop %v385
    %v898 = vtanh.pop %v386
    %v899 = vtanh.pop %v387
    %v900 = vtanh.pop %v388
    %v901 = vtanh.pop %v389
    %v902 = vtanh.pop %v390
    %v903 = vtanh.pop %v391
    %v904 = vtanh.pop %v392
    %v905 = vtanh.pop %v393
    %v906 = vtanh.pop %v394
    %v907 = vtanh.pop %v395
    %v908 = vtanh.pop %v396
    %v909 = vtanh.pop %v397
    %v910 = vtanh.pop %v398
    %v911 = vtanh.pop %v399
    %v912 = vtanh.pop %v400
    %v913 = vtanh.pop %v401
    %v914 = vtanh.pop %v402
    %v915 = vtanh.pop %v403
    %v916 = vtanh.pop %v404
    %v917 = vtanh.pop %v405
    %v918 = vtanh.pop %v406
    %v919 = vtanh.pop %v407
    %v920 = vtanh.pop %v408
    %v921 = vtanh.pop %v409
    %v922 = vtanh.pop %v410
    %v923 = vtanh.pop %v411
    %v924 = vtanh.pop %v412
    %v925 = vtanh.pop %v413
    %v926 = vtanh.pop %v414
    %v927 = vtanh.pop %v415
    %v928 = vtanh.pop %v416
    %v929 = vtanh.pop %v417
    %v930 = vtanh.pop %v418
    %v931 = vtanh.pop %v419
    %v932 = vtanh.pop %v420
    %v933 = vtanh.pop %v421
    %v934 = vtanh.pop %v422
    %v935 = vtanh.pop %v423
    %v936 = vtanh.pop %v424
    %v937 = vtanh.pop %v425
    %v938 = vtanh.pop %v426
    %v939 = vtanh.pop %v427
    %v940 = vtanh.pop %v428
    %v941 = vtanh.pop %v429
    %v942 = vtanh.pop %v430
    %v943 = vtanh.pop %v431
    %v944 = vtanh.pop %v432
    %v945 = vtanh.pop %v433
    %v946 = vtanh.pop %v434
    %v947 = vtanh.pop %v435
    %v948 = vtanh.pop %v436
    %v949 = vtanh.pop %v437
    %v950 = vtanh.pop %v438
    %v951 = vtanh.pop %v439
    %v952 = vtanh.pop %v440
    %v953 = vtanh.pop %v441
    %v954 = vtanh.pop %v442
    %v955 = vtanh.pop %v443
    %v956 = vtanh.pop %v444
    %v957 = vtanh.pop %v445
    %v958 = vtanh.pop %v446
    %v959 = vtanh.pop %v447
    %v960 = vtanh.pop %v448
    %v961 = vtanh.pop %v449
    %v962 = vtanh.pop %v450
    %v963 = vtanh.pop %v451
    %v964 = vtanh.pop %v452
    %v965 = vtanh.pop %v453
    %v966 = vtanh.pop %v454
    %v967 = vtanh.pop %v455
    %v968 = vtanh.pop %v456
    %v969 = vtanh.pop %v457
    %v970 = vtanh.pop %v458
    %v971 = vtanh.pop %v459
    %v972 = vtanh.pop %v460
    %v973 = vtanh.pop %v461
    %v974 = vtanh.pop %v462
    %v975 = vtanh.pop %v463
    %v976 = vtanh.pop %v464
    %v977 = vtanh.pop %v465
    %v978 = vtanh.pop %v466
    %v979 = vtanh.pop %v467
    %v980 = vtanh.pop %v468
    %v981 = vtanh.pop %v469
    %v982 = vtanh.pop %v470
    %v983 = vtanh.pop %v471
    %v984 = vtanh.pop %v472
    %v985 = vtanh.pop %v473
    %v986 = vtanh.pop %v474
    %v987 = vtanh.pop %v475
    %v988 = vtanh.pop %v476
    %v989 = vtanh.pop %v477
    %v990 = vtanh.pop %v478
    %v991 = vtanh.pop %v479
    %v992 = vtanh.pop %v480
    %v993 = vtanh.pop %v481
    %v994 = vtanh.pop %v482
    %v995 = vtanh.pop %v483
    %v996 = vtanh.pop %v484
    %v997 = vtanh.pop %v485
    %v998 = vtanh.pop %v486
    %v999 = vtanh.pop %v487
    %v1000 = vtanh.pop %v488
    %v1001 = vtanh.pop %v489
    %v1002 = vtanh.pop %v490
    %v1003 = vtanh.pop %v491
    %v1004 = vtanh.pop %v492
    %v1005 = vtanh.pop %v493
    %v1006 = vtanh.pop %v494
    %v1007 = vtanh.pop %v495
    %v1008 = vtanh.pop %v496
    %v1009 = vtanh.pop %v497
    %v1010 = vtanh.pop %v498
    %v1011 = vtanh.pop %v499
    %v1012 = vtanh.pop %v500
    %v1013 = vtanh.pop %v501
    %v1014 = vtanh.pop %v502
    %v1015 = vtanh.pop %v503
    %v1016 = vtanh.pop %v504
    %v1017 = vtanh.pop %v505
    %v1018 = vtanh.pop %v506
    %v1019 = vtanh.pop %v507
    %v1020 = vtanh.pop %v508
    %v1021 = vtanh.pop %v509
    %v1022 = vtanh.pop %v510
    %v1023 = vtanh.pop %v511
    %v1024 = vtanh.pop %v512
    %v1025 = vtanh.pop %v513
    %v1026 = vtanh.pop %v514
    %v1027 = vtanh.pop %v515
    %v1028 = vtanh.pop %v516
    %v1029 = vtanh.pop %v517
    %v1030 = vtanh.pop %v518
    %v1031 = vtanh.pop %v519
    %v1032 = vtanh.pop %v520
    %v1033 = vtanh.pop %v521
    %v1034 = vtanh.pop %v522
    %v1035 = vtanh.pop %v523
    %v1036 = vtanh.pop %v524
    %v1037 = vtanh.pop %v525
    %v1038 = vtanh.pop %v526
    %v1039 = vtanh.pop %v527
    %v1040 = vtanh.pop %v528
    %v1041 = vtanh.pop %v529
    %v1042 = vtanh.pop %v530
    %v1043 = vtanh.pop %v531
    %v1044 = vtanh.pop %v532
    %v1045 = vtanh.pop %v533
    %v1046 = vtanh.pop %v534
    %v1047 = vmul.f32 %v535, 2.0
    %v1048 = vmul.f32 %v536, 2.0
    %v1049 = vmul.f32 %v537, 2.0
    %v1050 = vmul.f32 %v538, 2.0
    %v1051 = vmul.f32 %v539, 2.0
    %v1052 = vmul.f32 %v540, 2.0
    %v1053 = vmul.f32 %v541, 2.0
    %v1054 = vmul.f32 %v542, 2.0
    %v1055 = vmul.f32 %v543, 2.0
    %v1056 = vmul.f32 %v544, 2.0
    %v1057 = vmul.f32 %v545, 2.0
    %v1058 = vmul.f32 %v546, 2.0
    %v1059 = vmul.f32 %v547, 2.0
    %v1060 = vmul.f32 %v548, 2.0
    %v1061 = vmul.f32 %v549, 2.0
    %v1062 = vmul.f32 %v550, 2.0
    %v1063 = vmul.f32 %v551, 2.0
    %v1064 = vmul.f32 %v552, 2.0
    %v1065 = vmul.f32 %v553, 2.0
    %v1066 = vmul.f32 %v554, 2.0
    %v1067 = vmul.f32 %v555, 2.0
    %v1068 = vmul.f32 %v556, 2.0
    %v1069 = vmul.f32 %v557, 2.0
    %v1070 = vmul.f32 %v558, 2.0
    %v1071 = vmul.f32 %v559, 2.0
    %v1072 = vmul.f32 %v560, 2.0
    %v1073 = vmul.f32 %v561, 2.0
    %v1074 = vmul.f32 %v562, 2.0
    %v1075 = vmul.f32 %v563, 2.0
    %v1076 = vmul.f32 %v564, 2.0
    %v1077 = vmul.f32 %v565, 2.0
    %v1078 = vmul.f32 %v566, 2.0
    %v1079 = vmul.f32 %v567, 2.0
    %v1080 = vmul.f32 %v568, 2.0
    %v1081 = vmul.f32 %v569, 2.0
    %v1082 = vmul.f32 %v570, 2.0
    %v1083 = vmul.f32 %v571, 2.0
    %v1084 = vmul.f32 %v572, 2.0
    %v1085 = vmul.f32 %v573, 2.0
    %v1086 = vmul.f32 %v574, 2.0
    %v1087 = vmul.f32 %v575, 2.0
    %v1088 = vmul.f32 %v576, 2.0
    %v1089 = vmul.f32 %v577, 2.0
    %v1090 = vmul.f32 %v578, 2.0
    %v1091 = vmul.f32 %v579, 2.0
    %v1092 = vmul.f32 %v580, 2.0
    %v1093 = vmul.f32 %v581, 2.0
    %v1094 = vmul.f32 %v582, 2.0
    %v1095 = vmul.f32 %v583, 2.0
    %v1096 = vmul.f32 %v584, 2.0
    %v1097 = vmul.f32 %v585, 2.0
    %v1098 = vmul.f32 %v586, 2.0
    %v1099 = vmul.f32 %v587, 2.0
    %v1100 = vmul.f32 %v588, 2.0
    %v1101 = vmul.f32 %v589, 2.0
    %v1102 = vmul.f32 %v590, 2.0
    %v1103 = vmul.f32 %v591, 2.0
    %v1104 = vmul.f32 %v592, 2.0
    %v1105 = vmul.f32 %v593, 2.0
    %v1106 = vmul.f32 %v594, 2.0
    %v1107 = vmul.f32 %v595, 2.0
    %v1108 = vmul.f32 %v596, 2.0
    %v1109 = vmul.f32 %v597, 2.0
    %v1110 = vmul.f32 %v598, 2.0
    %v1111 = vmul.f32 %v599, 2.0
    %v1112 = vmul.f32 %v600, 2.0
    %v1113 = vmul.f32 %v601, 2.0
    %v1114 = vmul.f32 %v602, 2.0
    %v1115 = vmul.f32 %v603, 2.0
    %v1116 = vmul.f32 %v604, 2.0
    %v1117 = vmul.f32 %v605, 2.0
    %v1118 = vmul.f32 %v606, 2.0
    %v1119 = vmul.f32 %v607, 2.0
    %v1120 = vmul.f32 %v608, 2.0
    %v1121 = vmul.f32 %v609, 2.0
    %v1122 = vmul.f32 %v610, 2.0
    %v1123 = vmul.f32 %v611, 2.0
    %v1124 = vmul.f32 %v612, 2.0
    %v1125 = vmul.f32 %v613, 2.0
    %v1126 = vmul.f32 %v614, 2.0
    %v1127 = vmul.f32 %v615, 2.0
    %v1128 = vmul.f32 %v616, 2.0
    %v1129 = vmul.f32 %v617, 2.0
    %v1130 = vmul.f32 %v618, 2.0
    %v1131 = vmul.f32 %v619, 2.0
    %v1132 = vmul.f32 %v620, 2.0
    %v1133 = vmul.f32 %v621, 2.0
    %v1134 = vmul.f32 %v622, 2.0
    %v1135 = vmul.f32 %v623, 2.0
    %v1136 = vmul.f32 %v624, 2.0
    %v1137 = vmul.f32 %v625, 2.0
    %v1138 = vmul.f32 %v626, 2.0
    %v1139 = vmul.f32 %v627, 2.0
    %v1140 = vmul.f32 %v628, 2.0
    %v1141 = vmul.f32 %v629, 2.0
    %v1142 = vmul.f32 %v630, 2.0
    %v1143 = vmul.f32 %v631, 2.0
    %v1144 = vmul.f32 %v632, 2.0
    %v1145 = vmul.f32 %v633, 2.0
    %v1146 = vmul.f32 %v634, 2.0
    %v1147 = vmul.f32 %v635, 2.0
    %v1148 = vmul.f32 %v636, 2.0
    %v1149 = vmul.f32 %v637, 2.0
    %v1150 = vmul.f32 %v638, 2.0
    %v1151 = vmul.f32 %v639, 2.0
    %v1152 = vmul.f32 %v640, 2.0
    %v1153 = vmul.f32 %v641, 2.0
    %v1154 = vmul.f32 %v642, 2.0
    %v1155 = vmul.f32 %v643, 2.0
    %v1156 = vmul.f32 %v644, 2.0
    %v1157 = vmul.f32 %v645, 2.0
    %v1158 = vmul.f32 %v646, 2.0
    %v1159 = vmul.f32 %v647, 2.0
    %v1160 = vmul.f32 %v648, 2.0
    %v1161 = vmul.f32 %v649, 2.0
    %v1162 = vmul.f32 %v650, 2.0
    %v1163 = vmul.f32 %v651, 2.0
    %v1164 = vmul.f32 %v652, 2.0
    %v1165 = vmul.f32 %v653, 2.0
    %v1166 = vmul.f32 %v654, 2.0
    %v1167 = vmul.f32 %v655, 2.0
    %v1168 = vmul.f32 %v656, 2.0
    %v1169 = vmul.f32 %v657, 2.0
    %v1170 = vmul.f32 %v658, 2.0
    %v1171 = vmul.f32 %v659, 2.0
    %v1172 = vmul.f32 %v660, 2.0
    %v1173 = vmul.f32 %v661, 2.0
    %v1174 = vmul.f32 %v662, 2.0
    %v1175 = vmul.f32 %v663, 2.0
    %v1176 = vmul.f32 %v664, 2.0
    %v1177 = vmul.f32 %v665, 2.0
    %v1178 = vmul.f32 %v666, 2.0
    %v1179 = vmul.f32 %v667, 2.0
    %v1180 = vmul.f32 %v668, 2.0
    %v1181 = vmul.f32 %v669, 2.0
    %v1182 = vmul.f32 %v670, 2.0
    %v1183 = vmul.f32 %v671, 2.0
    %v1184 = vmul.f32 %v672, 2.0
    %v1185 = vmul.f32 %v673, 2.0
    %v1186 = vmul.f32 %v674, 2.0
    %v1187 = vmul.f32 %v675, 2.0
    %v1188 = vmul.f32 %v676, 2.0
    %v1189 = vmul.f32 %v677, 2.0
    %v1190 = vmul.f32 %v678, 2.0
    %v1191 = vmul.f32 %v679, 2.0
    %v1192 = vmul.f32 %v680, 2.0
    %v1193 = vmul.f32 %v681, 2.0
    %v1194 = vmul.f32 %v682, 2.0
    %v1195 = vmul.f32 %v683, 2.0
    %v1196 = vmul.f32 %v684, 2.0
    %v1197 = vmul.f32 %v685, 2.0
    %v1198 = vmul.f32 %v686, 2.0
    %v1199 = vmul.f32 %v687, 2.0
    %v1200 = vmul.f32 %v688, 2.0
    %v1201 = vmul.f32 %v689, 2.0
    %v1202 = vmul.f32 %v690, 2.0
    %v1203 = vmul.f32 %v691, 2.0
    %v1204 = vmul.f32 %v692, 2.0
    %v1205 = vmul.f32 %v693, 2.0
    %v1206 = vmul.f32 %v694, 2.0
    %v1207 = vmul.f32 %v695, 2.0
    %v1208 = vmul.f32 %v696, 2.0
    %v1209 = vmul.f32 %v697, 2.0
    %v1210 = vmul.f32 %v698, 2.0
    %v1211 = vmul.f32 %v699, 2.0
    %v1212 = vmul.f32 %v700, 2.0
    %v1213 = vmul.f32 %v701, 2.0
    %v1214 = vmul.f32 %v702, 2.0
    %v1215 = vmul.f32 %v703, 2.0
    %v1216 = vmul.f32 %v704, 2.0
    %v1217 = vmul.f32 %v705, 2.0
    %v1218 = vmul.f32 %v706, 2.0
    %v1219 = vmul.f32 %v707, 2.0
    %v1220 = vmul.f32 %v708, 2.0
    %v1221 = vmul.f32 %v709, 2.0
    %v1222 = vmul.f32 %v710, 2.0
    %v1223 = vmul.f32 %v711, 2.0
    %v1224 = vmul.f32 %v712, 2.0
    %v1225 = vmul.f32 %v713, 2.0
    %v1226 = vmul.f32 %v714, 2.0
    %v1227 = vmul.f32 %v715, 2.0
    %v1228 = vmul.f32 %v716, 2.0
    %v1229 = vmul.f32 %v717, 2.0
    %v1230 = vmul.f32 %v718, 2.0
    %v1231 = vmul.f32 %v719, 2.0
    %v1232 = vmul.f32 %v720, 2.0
    %v1233 = vmul.f32 %v721, 2.0
    %v1234 = vmul.f32 %v722, 2.0
    %v1235 = vmul.f32 %v723, 2.0
    %v1236 = vmul.f32 %v724, 2.0
    %v1237 = vmul.f32 %v725, 2.0
    %v1238 = vmul.f32 %v726, 2.0
    %v1239 = vmul.f32 %v727, 2.0
    %v1240 = vmul.f32 %v728, 2.0
    %v1241 = vmul.f32 %v729, 2.0
    %v1242 = vmul.f32 %v730, 2.0
    %v1243 = vmul.f32 %v731, 2.0
    %v1244 = vmul.f32 %v732, 2.0
    %v1245 = vmul.f32 %v733, 2.0
    %v1246 = vmul.f32 %v734, 2.0
    %v1247 = vmul.f32 %v735, 2.0
    %v1248 = vmul.f32 %v736, 2.0
    %v1249 = vmul.f32 %v737, 2.0
    %v1250 = vmul.f32 %v738, 2.0
    %v1251 = vmul.f32 %v739, 2.0
    %v1252 = vmul.f32 %v740, 2.0
    %v1253 = vmul.f32 %v741, 2.0
    %v1254 = vmul.f32 %v742, 2.0
    %v1255 = vmul.f32 %v743, 2.0
    %v1256 = vmul.f32 %v744, 2.0
    %v1257 = vmul.f32 %v745, 2.0
    %v1258 = vmul.f32 %v746, 2.0
    %v1259 = vmul.f32 %v747, 2.0
    %v1260 = vmul.f32 %v748, 2.0
    %v1261 = vmul.f32 %v749, 2.0
    %v1262 = vmul.f32 %v750, 2.0
    %v1263 = vmul.f32 %v751, 2.0
    %v1264 = vmul.f32 %v752, 2.0
    %v1265 = vmul.f32 %v753, 2.0
    %v1266 = vmul.f32 %v754, 2.0
    %v1267 = vmul.f32 %v755, 2.0
    %v1268 = vmul.f32 %v756, 2.0
    %v1269 = vmul.f32 %v757, 2.0
    %v1270 = vmul.f32 %v758, 2.0
    %v1271 = vmul.f32 %v759, 2.0
    %v1272 = vmul.f32 %v760, 2.0
    %v1273 = vmul.f32 %v761, 2.0
    %v1274 = vmul.f32 %v762, 2.0
    %v1275 = vmul.f32 %v763, 2.0
    %v1276 = vmul.f32 %v764, 2.0
    %v1277 = vmul.f32 %v765, 2.0
    %v1278 = vmul.f32 %v766, 2.0
    %v1279 = vmul.f32 %v767, 2.0
    %v1280 = vmul.f32 %v768, 2.0
    %v1281 = vmul.f32 %v769, 2.0
    %v1282 = vmul.f32 %v770, 2.0
    %v1283 = vmul.f32 %v771, 2.0
    %v1284 = vmul.f32 %v772, 2.0
    %v1285 = vmul.f32 %v773, 2.0
    %v1286 = vmul.f32 %v774, 2.0
    %v1287 = vmul.f32 %v775, 2.0
    %v1288 = vmul.f32 %v776, 2.0
    %v1289 = vmul.f32 %v777, 2.0
    %v1290 = vmul.f32 %v778, 2.0
    %v1291 = vmul.f32 %v779, 2.0
    %v1292 = vmul.f32 %v780, 2.0
    %v1293 = vmul.f32 %v781, 2.0
    %v1294 = vmul.f32 %v782, 2.0
    %v1295 = vmul.f32 %v783, 2.0
    %v1296 = vmul.f32 %v784, 2.0
    %v1297 = vmul.f32 %v785, 2.0
    %v1298 = vmul.f32 %v786, 2.0
    %v1299 = vmul.f32 %v787, 2.0
    %v1300 = vmul.f32 %v788, 2.0
    %v1301 = vmul.f32 %v789, 2.0
    %v1302 = vmul.f32 %v790, 2.0
    %v1303 = vmul.f32 %v791, 2.0
    %v1304 = vmul.f32 %v792, 2.0
    %v1305 = vmul.f32 %v793, 2.0
    %v1306 = vmul.f32 %v794, 2.0
    %v1307 = vmul.f32 %v795, 2.0
    %v1308 = vmul.f32 %v796, 2.0
    %v1309 = vmul.f32 %v797, 2.0
    %v1310 = vmul.f32 %v798, 2.0
    %v1311 = vmul.f32 %v799, 2.0
    %v1312 = vmul.f32 %v800, 2.0
    %v1313 = vmul.f32 %v801, 2.0
    %v1314 = vmul.f32 %v802, 2.0
    %v1315 = vmul.f32 %v803, 2.0
    %v1316 = vmul.f32 %v804, 2.0
    %v1317 = vmul.f32 %v805, 2.0
    %v1318 = vmul.f32 %v806, 2.0
    %v1319 = vmul.f32 %v807, 2.0
    %v1320 = vmul.f32 %v808, 2.0
    %v1321 = vmul.f32 %v809, 2.0
    %v1322 = vmul.f32 %v810, 2.0
    %v1323 = vmul.f32 %v811, 2.0
    %v1324 = vmul.f32 %v812, 2.0
    %v1325 = vmul.f32 %v813, 2.0
    %v1326 = vmul.f32 %v814, 2.0
    %v1327 = vmul.f32 %v815, 2.0
    %v1328 = vmul.f32 %v816, 2.0
    %v1329 = vmul.f32 %v817, 2.0
    %v1330 = vmul.f32 %v818, 2.0
    %v1331 = vmul.f32 %v819, 2.0
    %v1332 = vmul.f32 %v820, 2.0
    %v1333 = vmul.f32 %v821, 2.0
    %v1334 = vmul.f32 %v822, 2.0
    %v1335 = vmul.f32 %v823, 2.0
    %v1336 = vmul.f32 %v824, 2.0
    %v1337 = vmul.f32 %v825, 2.0
    %v1338 = vmul.f32 %v826, 2.0
    %v1339 = vmul.f32 %v827, 2.0
    %v1340 = vmul.f32 %v828, 2.0
    %v1341 = vmul.f32 %v829, 2.0
    %v1342 = vmul.f32 %v830, 2.0
    %v1343 = vmul.f32 %v831, 2.0
    %v1344 = vmul.f32 %v832, 2.0
    %v1345 = vmul.f32 %v833, 2.0
    %v1346 = vmul.f32 %v834, 2.0
    %v1347 = vmul.f32 %v835, 2.0
    %v1348 = vmul.f32 %v836, 2.0
    %v1349 = vmul.f32 %v837, 2.0
    %v1350 = vmul.f32 %v838, 2.0
    %v1351 = vmul.f32 %v839, 2.0
    %v1352 = vmul.f32 %v840, 2.0
    %v1353 = vmul.f32 %v841, 2.0
    %v1354 = vmul.f32 %v842, 2.0
    %v1355 = vmul.f32 %v843, 2.0
    %v1356 = vmul.f32 %v844, 2.0
    %v1357 = vmul.f32 %v845, 2.0
    %v1358 = vmul.f32 %v846, 2.0
    %v1359 = vmul.f32 %v847, 2.0
    %v1360 = vmul.f32 %v848, 2.0
    %v1361 = vmul.f32 %v849, 2.0
    %v1362 = vmul.f32 %v850, 2.0
    %v1363 = vmul.f32 %v851, 2.0
    %v1364 = vmul.f32 %v852, 2.0
    %v1365 = vmul.f32 %v853, 2.0
    %v1366 = vmul.f32 %v854, 2.0
    %v1367 = vmul.f32 %v855, 2.0
    %v1368 = vmul.f32 %v856, 2.0
    %v1369 = vmul.f32 %v857, 2.0
    %v1370 = vmul.f32 %v858, 2.0
    %v1371 = vmul.f32 %v859, 2.0
    %v1372 = vmul.f32 %v860, 2.0
    %v1373 = vmul.f32 %v861, 2.0
    %v1374 = vmul.f32 %v862, 2.0
    %v1375 = vmul.f32 %v863, 2.0
    %v1376 = vmul.f32 %v864, 2.0
    %v1377 = vmul.f32 %v865, 2.0
    %v1378 = vmul.f32 %v866, 2.0
    %v1379 = vmul.f32 %v867, 2.0
    %v1380 = vmul.f32 %v868, 2.0
    %v1381 = vmul.f32 %v869, 2.0
    %v1382 = vmul.f32 %v870, 2.0
    %v1383 = vmul.f32 %v871, 2.0
    %v1384 = vmul.f32 %v872, 2.0
    %v1385 = vmul.f32 %v873, 2.0
    %v1386 = vmul.f32 %v874, 2.0
    %v1387 = vmul.f32 %v875, 2.0
    %v1388 = vmul.f32 %v876, 2.0
    %v1389 = vmul.f32 %v877, 2.0
    %v1390 = vmul.f32 %v878, 2.0
    %v1391 = vmul.f32 %v879, 2.0
    %v1392 = vmul.f32 %v880, 2.0
    %v1393 = vmul.f32 %v881, 2.0
    %v1394 = vmul.f32 %v882, 2.0
    %v1395 = vmul.f32 %v883, 2.0
    %v1396 = vmul.f32 %v884, 2.0
    %v1397 = vmul.f32 %v885, 2.0
    %v1398 = vmul.f32 %v886, 2.0
    %v1399 = vmul.f32 %v887, 2.0
    %v1400 = vmul.f32 %v888, 2.0
    %v1401 = vmul.f32 %v889, 2.0
    %v1402 = vmul.f32 %v890, 2.0
    %v1403 = vmul.f32 %v891, 2.0
    %v1404 = vmul.f32 %v892, 2.0
    %v1405 = vmul.f32 %v893, 2.0
    %v1406 = vmul.f32 %v894, 2.0
    %v1407 = vmul.f32 %v895, 2.0
    %v1408 = vmul.f32 %v896, 2.0
    %v1409 = vmul.f32 %v897, 2.0
    %v1410 = vmul.f32 %v898, 2.0
    %v1411 = vmul.f32 %v899, 2.0
    %v1412 = vmul.f32 %v900, 2.0
    %v1413 = vmul.f32 %v901, 2.0
    %v1414 = vmul.f32 %v902, 2.0
    %v1415 = vmul.f32 %v903, 2.0
    %v1416 = vmul.f32 %v904, 2.0
    %v1417 = vmul.f32 %v905, 2.0
    %v1418 = vmul.f32 %v906, 2.0
    %v1419 = vmul.f32 %v907, 2.0
    %v1420 = vmul.f32 %v908, 2.0
    %v1421 = vmul.f32 %v909, 2.0
    %v1422 = vmul.f32 %v910, 2.0
    %v1423 = vmul.f32 %v911, 2.0
    %v1424 = vmul.f32 %v912, 2.0
    %v1425 = vmul.f32 %v913, 2.0
    %v1426 = vmul.f32 %v914, 2.0
    %v1427 = vmul.f32 %v915, 2.0
    %v1428 = vmul.f32 %v916, 2.0
    %v1429 = vmul.f32 %v917, 2.0
    %v1430 = vmul.f32 %v918, 2.0
    %v1431 = vmul.f32 %v919, 2.0
    %v1432 = vmul.f32 %v920, 2.0
    %v1433 = vmul.f32 %v921, 2.0
    %v1434 = vmul.f32 %v922, 2.0
    %v1435 = vmul.f32 %v923, 2.0
    %v1436 = vmul.f32 %v924, 2.0
    %v1437 = vmul.f32 %v925, 2.0
    %v1438 = vmul.f32 %v926, 2.0
    %v1439 = vmul.f32 %v927, 2.0
    %v1440 = vmul.f32 %v928, 2.0
    %v1441 = vmul.f32 %v929, 2.0
    %v1442 = vmul.f32 %v930, 2.0
    %v1443 = vmul.f32 %v931, 2.0
    %v1444 = vmul.f32 %v932, 2.0
    %v1445 = vmul.f32 %v933, 2.0
    %v1446 = vmul.f32 %v934, 2.0
    %v1447 = vmul.f32 %v935, 2.0
    %v1448 = vmul.f32 %v936, 2.0
    %v1449 = vmul.f32 %v937, 2.0
    %v1450 = vmul.f32 %v938, 2.0
    %v1451 = vmul.f32 %v939, 2.0
    %v1452 = vmul.f32 %v940, 2.0
    %v1453 = vmul.f32 %v941, 2.0
    %v1454 = vmul.f32 %v942, 2.0
    %v1455 = vmul.f32 %v943, 2.0
    %v1456 = vmul.f32 %v944, 2.0
    %v1457 = vmul.f32 %v945, 2.0
    %v1458 = vmul.f32 %v946, 2.0
    %v1459 = vmul.f32 %v947, 2.0
    %v1460 = vmul.f32 %v948, 2.0
    %v1461 = vmul.f32 %v949, 2.0
    %v1462 = vmul.f32 %v950, 2.0
    %v1463 = vmul.f32 %v951, 2.0
    %v1464 = vmul.f32 %v952, 2.0
    %v1465 = vmul.f32 %v953, 2.0
    %v1466 = vmul.f32 %v954, 2.0
    %v1467 = vmul.f32 %v955, 2.0
    %v1468 = vmul.f32 %v956, 2.0
    %v1469 = vmul.f32 %v957, 2.0
    %v1470 = vmul.f32 %v958, 2.0
    %v1471 = vmul.f32 %v959, 2.0
    %v1472 = vmul.f32 %v960, 2.0
    %v1473 = vmul.f32 %v961, 2.0
    %v1474 = vmul.f32 %v962, 2.0
    %v1475 = vmul.f32 %v963, 2.0
    %v1476 = vmul.f32 %v964, 2.0
    %v1477 = vmul.f32 %v965, 2.0
    %v1478 = vmul.f32 %v966, 2.0
    %v1479 = vmul.f32 %v967, 2.0
    %v1480 = vmul.f32 %v968, 2.0
    %v1481 = vmul.f32 %v969, 2.0
    %v1482 = vmul.f32 %v970, 2.0
    %v1483 = vmul.f32 %v971, 2.0
    %v1484 = vmul.f32 %v972, 2.0
    %v1485 = vmul.f32 %v973, 2.0
    %v1486 = vmul.f32 %v974, 2.0
    %v1487 = vmul.f32 %v975, 2.0
    %v1488 = vmul.f32 %v976, 2.0
    %v1489 = vmul.f32 %v977, 2.0
    %v1490 = vmul.f32 %v978, 2.0
    %v1491 = vmul.f32 %v979, 2.0
    %v1492 = vmul.f32 %v980, 2.0
    %v1493 = vmul.f32 %v981, 2.0
    %v1494 = vmul.f32 %v982, 2.0
    %v1495 = vmul.f32 %v983, 2.0
    %v1496 = vmul.f32 %v984, 2.0
    %v1497 = vmul.f32 %v985, 2.0
    %v1498 = vmul.f32 %v986, 2.0
    %v1499 = vmul.f32 %v987, 2.0
    %v1500 = vmul.f32 %v988, 2.0
    %v1501 = vmul.f32 %v989, 2.0
    %v1502 = vmul.f32 %v990, 2.0
    %v1503 = vmul.f32 %v991, 2.0
    %v1504 = vmul.f32 %v992, 2.0
    %v1505 = vmul.f32 %v993, 2.0
    %v1506 = vmul.f32 %v994, 2.0
    %v1507 = vmul.f32 %v995, 2.0
    %v1508 = vmul.f32 %v996, 2.0
    %v1509 = vmul.f32 %v997, 2.0
    %v1510 = vmul.f32 %v998, 2.0
    %v1511 = vmul.f32 %v999, 2.0
    %v1512 = vmul.f32 %v1000, 2.0
    %v1513 = vmul.f32 %v1001, 2.0
    %v1514 = vmul.f32 %v1002, 2.0
    %v1515 = vmul.f32 %v1003, 2.0
    %v1516 = vmul.f32 %v1004, 2.0
    %v1517 = vmul.f32 %v1005, 2.0
    %v1518 = vmul.f32 %v1006, 2.0
    %v1519 = vmul.f32 %v1007, 2.0
    %v1520 = vmul.f32 %v1008, 2.0
    %v1521 = vmul.f32 %v1009, 2.0
    %v1522 = vmul.f32 %v1010, 2.0
    %v1523 = vmul.f32 %v1011, 2.0
    %v1524 = vmul.f32 %v1012, 2.0
    %v1525 = vmul.f32 %v1013, 2.0
    %v1526 = vmul.f32 %v1014, 2.0
    %v1527 = vmul.f32 %v1015, 2.0
    %v1528 = vmul.f32 %v1016, 2.0
    %v1529 = vmul.f32 %v1017, 2.0
    %v1530 = vmul.f32 %v1018, 2.0
    %v1531 = vmul.f32 %v1019, 2.0
    %v1532 = vmul.f32 %v1020, 2.0
    %v1533 = vmul.f32 %v1021, 2.0
    %v1534 = vmul.f32 %v1022, 2.0
    %v1535 = vmul.f32 %v1023, 2.0
    %v1536 = vmul.f32 %v1024, 2.0
    %v1537 = vmul.f32 %v1025, 2.0
    %v1538 = vmul.f32 %v1026, 2.0
    %v1539 = vmul.f32 %v1027, 2.0
    %v1540 = vmul.f32 %v1028, 2.0
    %v1541 = vmul.f32 %v1029, 2.0
    %v1542 = vmul.f32 %v1030, 2.0
    %v1543 = vmul.f32 %v1031, 2.0
    %v1544 = vmul.f32 %v1032, 2.0
    %v1545 = vmul.f32 %v1033, 2.0
    %v1546 = vmul.f32 %v1034, 2.0
    %v1547 = vmul.f32 %v1035, 2.0
    %v1548 = vmul.f32 %v1036, 2.0
    %v1549 = vmul.f32 %v1037, 2.0
    %v1550 = vmul.f32 %v1038, 2.0
    %v1551 = vmul.f32 %v1039, 2.0
    %v1552 = vmul.f32 %v1040, 2.0
    %v1553 = vmul.f32 %v1041, 2.0
    %v1554 = vmul.f32 %v1042, 2.0
    %v1555 = vmul.f32 %v1043, 2.0
    %v1556 = vmul.f32 %v1044, 2.0
    %v1557 = vmul.f32 %v1045, 2.0
    %v1558 = vmul.f32 %v1046, 2.0
    %v1559 = vadd.f32 %v1047, 0.5
    %v1560 = vadd.f32 %v1048, 0.5
    %v1561 = vadd.f32 %v1049, 0.5
    %v1562 = vadd.f32 %v1050, 0.5
    %v1563 = vadd.f32 %v1051, 0.5
    %v1564 = vadd.f32 %v1052, 0.5
    %v1565 = vadd.f32 %v1053, 0.5
    %v1566 = vadd.f32 %v1054, 0.5
    %v1567 = vadd.f32 %v1055, 0.5
    %v1568 = vadd.f32 %v1056, 0.5
    %v1569 = vadd.f32 %v1057, 0.5
    %v1570 = vadd.f32 %v1058, 0.5
    %v1571 = vadd.f32 %v1059, 0.5
    %v1572 = vadd.f32 %v1060, 0.5
    %v1573 = vadd.f32 %v1061, 0.5
    %v1574 = vadd.f32 %v1062, 0.5
    %v1575 = vadd.f32 %v1063, 0.5
    %v1576 = vadd.f32 %v1064, 0.5
    %v1577 = vadd.f32 %v1065, 0.5
    %v1578 = vadd.f32 %v1066, 0.5
    %v1579 = vadd.f32 %v1067, 0.5
    %v1580 = vadd.f32 %v1068, 0.5
    %v1581 = vadd.f32 %v1069, 0.5
    %v1582 = vadd.f32 %v1070, 0.5
    %v1583 = vadd.f32 %v1071, 0.5
    %v1584 = vadd.f32 %v1072, 0.5
    %v1585 = vadd.f32 %v1073, 0.5
    %v1586 = vadd.f32 %v1074, 0.5
    %v1587 = vadd.f32 %v1075, 0.5
    %v1588 = vadd.f32 %v1076, 0.5
    %v1589 = vadd.f32 %v1077, 0.5
    %v1590 = vadd.f32 %v1078, 0.5
    %v1591 = vadd.f32 %v1079, 0.5
    %v1592 = vadd.f32 %v1080, 0.5
    %v1593 = vadd.f32 %v1081, 0.5
    %v1594 = vadd.f32 %v1082, 0.5
    %v1595 = vadd.f32 %v1083, 0.5
    %v1596 = vadd.f32 %v1084, 0.5
    %v1597 = vadd.f32 %v1085, 0.5
    %v1598 = vadd.f32 %v1086, 0.5
    %v1599 = vadd.f32 %v1087, 0.5
    %v1600 = vadd.f32 %v1088, 0.5
    %v1601 = vadd.f32 %v1089, 0.5
    %v1602 = vadd.f32 %v1090, 0.5
    %v1603 = vadd.f32 %v1091, 0.5
    %v1604 = vadd.f32 %v1092, 0.5
    %v1605 = vadd.f32 %v1093, 0.5
    %v1606 = vadd.f32 %v1094, 0.5
    %v1607 = vadd.f32 %v1095, 0.5
    %v1608 = vadd.f32 %v1096, 0.5
    %v1609 = vadd.f32 %v1097, 0.5
    %v1610 = vadd.f32 %v1098, 0.5
    %v1611 = vadd.f32 %v1099, 0.5
    %v1612 = vadd.f32 %v1100, 0.5
    %v1613 = vadd.f32 %v1101, 0.5
    %v1614 = vadd.f32 %v1102, 0.5
    %v1615 = vadd.f32 %v1103, 0.5
    %v1616 = vadd.f32 %v1104, 0.5
    %v1617 = vadd.f32 %v1105, 0.5
    %v1618 = vadd.f32 %v1106, 0.5
    %v1619 = vadd.f32 %v1107, 0.5
    %v1620 = vadd.f32 %v1108, 0.5
    %v1621 = vadd.f32 %v1109, 0.5
    %v1622 = vadd.f32 %v1110, 0.5
    %v1623 = vadd.f32 %v1111, 0.5
    %v1624 = vadd.f32 %v1112, 0.5
    %v1625 = vadd.f32 %v1113, 0.5
    %v1626 = vadd.f32 %v1114, 0.5
    %v1627 = vadd.f32 %v1115, 0.5
    %v1628 = vadd.f32 %v1116, 0.5
    %v1629 = vadd.f32 %v1117, 0.5
    %v1630 = vadd.f32 %v1118, 0.5
    %v1631 = vadd.f32 %v1119, 0.5
    %v1632 = vadd.f32 %v1120, 0.5
    %v1633 = vadd.f32 %v1121, 0.5
    %v1634 = vadd.f32 %v1122, 0.5
    %v1635 = vadd.f32 %v1123, 0.5
    %v1636 = vadd.f32 %v1124, 0.5
    %v1637 = vadd.f32 %v1125, 0.5
    %v1638 = vadd.f32 %v1126, 0.5
    %v1639 = vadd.f32 %v1127, 0.5
    %v1640 = vadd.f32 %v1128, 0.5
    %v1641 = vadd.f32 %v1129, 0.5
    %v1642 = vadd.f32 %v1130, 0.5
    %v1643 = vadd.f32 %v1131, 0.5
    %v1644 = vadd.f32 %v1132, 0.5
    %v1645 = vadd.f32 %v1133, 0.5
    %v1646 = vadd.f32 %v1134, 0.5
    %v1647 = vadd.f32 %v1135, 0.5
    %v1648 = vadd.f32 %v1136, 0.5
    %v1649 = vadd.f32 %v1137, 0.5
    %v1650 = vadd.f32 %v1138, 0.5
    %v1651 = vadd.f32 %v1139, 0.5
    %v1652 = vadd.f32 %v1140, 0.5
    %v1653 = vadd.f32 %v1141, 0.5
    %v1654 = vadd.f32 %v1142, 0.5
    %v1655 = vadd.f32 %v1143, 0.5
    %v1656 = vadd.f32 %v1144, 0.5
    %v1657 = vadd.f32 %v1145, 0.5
    %v1658 = vadd.f32 %v1146, 0.5
    %v1659 = vadd.f32 %v1147, 0.5
    %v1660 = vadd.f32 %v1148, 0.5
    %v1661 = vadd.f32 %v1149, 0.5
    %v1662 = vadd.f32 %v1150, 0.5
    %v1663 = vadd.f32 %v1151, 0.5
    %v1664 = vadd.f32 %v1152, 0.5
    %v1665 = vadd.f32 %v1153, 0.5
    %v1666 = vadd.f32 %v1154, 0.5
    %v1667 = vadd.f32 %v1155, 0.5
    %v1668 = vadd.f32 %v1156, 0.5
    %v1669 = vadd.f32 %v1157, 0.5
    %v1670 = vadd.f32 %v1158, 0.5
    %v1671 = vadd.f32 %v1159, 0.5
    %v1672 = vadd.f32 %v1160, 0.5
    %v1673 = vadd.f32 %v1161, 0.5
    %v1674 = vadd.f32 %v1162, 0.5
    %v1675 = vadd.f32 %v1163, 0.5
    %v1676 = vadd.f32 %v1164, 0.5
    %v1677 = vadd.f32 %v1165, 0.5
    %v1678 = vadd.f32 %v1166, 0.5
    %v1679 = vadd.f32 %v1167, 0.5
    %v1680 = vadd.f32 %v1168, 0.5
    %v1681 = vadd.f32 %v1169, 0.5
    %v1682 = vadd.f32 %v1170, 0.5
    %v1683 = vadd.f32 %v1171, 0.5
    %v1684 = vadd.f32 %v1172, 0.5
    %v1685 = vadd.f32 %v1173, 0.5
    %v1686 = vadd.f32 %v1174, 0.5
    %v1687 = vadd.f32 %v1175, 0.5
    %v1688 = vadd.f32 %v1176, 0.5
    %v1689 = vadd.f32 %v1177, 0.5
    %v1690 = vadd.f32 %v1178, 0.5
    %v1691 = vadd.f32 %v1179, 0.5
    %v1692 = vadd.f32 %v1180, 0.5
    %v1693 = vadd.f32 %v1181, 0.5
    %v1694 = vadd.f32 %v1182, 0.5
    %v1695 = vadd.f32 %v1183, 0.5
    %v1696 = vadd.f32 %v1184, 0.5
    %v1697 = vadd.f32 %v1185, 0.5
    %v1698 = vadd.f32 %v1186, 0.5
    %v1699 = vadd.f32 %v1187, 0.5
    %v1700 = vadd.f32 %v1188, 0.5
    %v1701 = vadd.f32 %v1189, 0.5
    %v1702 = vadd.f32 %v1190, 0.5
    %v1703 = vadd.f32 %v1191, 0.5
    %v1704 = vadd.f32 %v1192, 0.5
    %v1705 = vadd.f32 %v1193, 0.5
    %v1706 = vadd.f32 %v1194, 0.5
    %v1707 = vadd.f32 %v1195, 0.5
    %v1708 = vadd.f32 %v1196, 0.5
    %v1709 = vadd.f32 %v1197, 0.5
    %v1710 = vadd.f32 %v1198, 0.5
    %v1711 = vadd.f32 %v1199, 0.5
    %v1712 = vadd.f32 %v1200, 0.5
    %v1713 = vadd.f32 %v1201, 0.5
    %v1714 = vadd.f32 %v1202, 0.5
    %v1715 = vadd.f32 %v1203, 0.5
    %v1716 = vadd.f32 %v1204, 0.5
    %v1717 = vadd.f32 %v1205, 0.5
    %v1718 = vadd.f32 %v1206, 0.5
    %v1719 = vadd.f32 %v1207, 0.5
    %v1720 = vadd.f32 %v1208, 0.5
    %v1721 = vadd.f32 %v1209, 0.5
    %v1722 = vadd.f32 %v1210, 0.5
    %v1723 = vadd.f32 %v1211, 0.5
    %v1724 = vadd.f32 %v1212, 0.5
    %v1725 = vadd.f32 %v1213, 0.5
    %v1726 = vadd.f32 %v1214, 0.5
    %v1727 = vadd.f32 %v1215, 0.5
    %v1728 = vadd.f32 %v1216, 0.5
    %v1729 = vadd.f32 %v1217, 0.5
    %v1730 = vadd.f32 %v1218, 0.5
    %v1731 = vadd.f32 %v1219, 0.5
    %v1732 = vadd.f32 %v1220, 0.5
    %v1733 = vadd.f32 %v1221, 0.5
    %v1734 = vadd.f32 %v1222, 0.5
    %v1735 = vadd.f32 %v1223, 0.5
    %v1736 = vadd.f32 %v1224, 0.5
    %v1737 = vadd.f32 %v1225, 0.5
    %v1738 = vadd.f32 %v1226, 0.5
    %v1739 = vadd.f32 %v1227, 0.5
    %v1740 = vadd.f32 %v1228, 0.5
    %v1741 = vadd.f32 %v1229, 0.5
    %v1742 = vadd.f32 %v1230, 0.5
    %v1743 = vadd.f32 %v1231, 0.5
    %v1744 = vadd.f32 %v1232, 0.5
    %v1745 = vadd.f32 %v1233, 0.5
    %v1746 = vadd.f32 %v1234, 0.5
    %v1747 = vadd.f32 %v1235, 0.5
    %v1748 = vadd.f32 %v1236, 0.5
    %v1749 = vadd.f32 %v1237, 0.5
    %v1750 = vadd.f32 %v1238, 0.5
    %v1751 = vadd.f32 %v1239, 0.5
    %v1752 = vadd.f32 %v1240, 0.5
    %v1753 = vadd.f32 %v1241, 0.5
    %v1754 = vadd.f32 %v1242, 0.5
    %v1755 = vadd.f32 %v1243, 0.5
    %v1756 = vadd.f32 %v1244, 0.5
    %v1757 = vadd.f32 %v1245, 0.5
    %v1758 = vadd.f32 %v1246, 0.5
    %v1759 = vadd.f32 %v1247, 0.5
    %v1760 = vadd.f32 %v1248, 0.5
    %v1761 = vadd.f32 %v1249, 0.5
    %v1762 = vadd.f32 %v1250, 0.5
    %v1763 = vadd.f32 %v1251, 0.5
    %v1764 = vadd.f32 %v1252, 0.5
    %v1765 = vadd.f32 %v1253, 0.5
    %v1766 = vadd.f32 %v1254, 0.5
    %v1767 = vadd.f32 %v1255, 0.5
    %v1768 = vadd.f32 %v1256, 0.5
    %v1769 = vadd.f32 %v1257, 0.5
    %v1770 = vadd.f32 %v1258, 0.5
    %v1771 = vadd.f32 %v1259, 0.5
    %v1772 = vadd.f32 %v1260, 0.5
    %v1773 = vadd.f32 %v1261, 0.5
    %v1774 = vadd.f32 %v1262, 0.5
    %v1775 = vadd.f32 %v1263, 0.5
    %v1776 = vadd.f32 %v1264, 0.5
    %v1777 = vadd.f32 %v1265, 0.5
    %v1778 = vadd.f32 %v1266, 0.5
    %v1779 = vadd.f32 %v1267, 0.5
    %v1780 = vadd.f32 %v1268, 0.5
    %v1781 = vadd.f32 %v1269, 0.5
    %v1782 = vadd.f32 %v1270, 0.5
    %v1783 = vadd.f32 %v1271, 0.5
    %v1784 = vadd.f32 %v1272, 0.5
    %v1785 = vadd.f32 %v1273, 0.5
    %v1786 = vadd.f32 %v1274, 0.5
    %v1787 = vadd.f32 %v1275, 0.5
    %v1788 = vadd.f32 %v1276, 0.5
    %v1789 = vadd.f32 %v1277, 0.5
    %v1790 = vadd.f32 %v1278, 0.5
    %v1791 = vadd.f32 %v1279, 0.5
    %v1792 = vadd.f32 %v1280, 0.5
    %v1793 = vadd.f32 %v1281, 0.5
    %v1794 = vadd.f32 %v1282, 0.5
    %v1795 = vadd.f32 %v1283, 0.5
    %v1796 = vadd.f32 %v1284, 0.5
    %v1797 = vadd.f32 %v1285, 0.5
    %v1798 = vadd.f32 %v1286, 0.5
    %v1799 = vadd.f32 %v1287, 0.5
    %v1800 = vadd.f32 %v1288, 0.5
    %v1801 = vadd.f32 %v1289, 0.5
    %v1802 = vadd.f32 %v1290, 0.5
    %v1803 = vadd.f32 %v1291, 0.5
    %v1804 = vadd.f32 %v1292, 0.5
    %v1805 = vadd.f32 %v1293, 0.5
    %v1806 = vadd.f32 %v1294, 0.5
    %v1807 = vadd.f32 %v1295, 0.5
    %v1808 = vadd.f32 %v1296, 0.5
    %v1809 = vadd.f32 %v1297, 0.5
    %v1810 = vadd.f32 %v1298, 0.5
    %v1811 = vadd.f32 %v1299, 0.5
    %v1812 = vadd.f32 %v1300, 0.5
    %v1813 = vadd.f32 %v1301, 0.5
    %v1814 = vadd.f32 %v1302, 0.5
    %v1815 = vadd.f32 %v1303, 0.5
    %v1816 = vadd.f32 %v1304, 0.5
    %v1817 = vadd.f32 %v1305, 0.5
    %v1818 = vadd.f32 %v1306, 0.5
    %v1819 = vadd.f32 %v1307, 0.5
    %v1820 = vadd.f32 %v1308, 0.5
    %v1821 = vadd.f32 %v1309, 0.5
    %v1822 = vadd.f32 %v1310, 0.5
    %v1823 = vadd.f32 %v1311, 0.5
    %v1824 = vadd.f32 %v1312, 0.5
    %v1825 = vadd.f32 %v1313, 0.5
    %v1826 = vadd.f32 %v1314, 0.5
    %v1827 = vadd.f32 %v1315, 0.5
    %v1828 = vadd.f32 %v1316, 0.5
    %v1829 = vadd.f32 %v1317, 0.5
    %v1830 = vadd.f32 %v1318, 0.5
    %v1831 = vadd.f32 %v1319, 0.5
    %v1832 = vadd.f32 %v1320, 0.5
    %v1833 = vadd.f32 %v1321, 0.5
    %v1834 = vadd.f32 %v1322, 0.5
    %v1835 = vadd.f32 %v1323, 0.5
    %v1836 = vadd.f32 %v1324, 0.5
    %v1837 = vadd.f32 %v1325, 0.5
    %v1838 = vadd.f32 %v1326, 0.5
    %v1839 = vadd.f32 %v1327, 0.5
    %v1840 = vadd.f32 %v1328, 0.5
    %v1841 = vadd.f32 %v1329, 0.5
    %v1842 = vadd.f32 %v1330, 0.5
    %v1843 = vadd.f32 %v1331, 0.5
    %v1844 = vadd.f32 %v1332, 0.5
    %v1845 = vadd.f32 %v1333, 0.5
    %v1846 = vadd.f32 %v1334, 0.5
    %v1847 = vadd.f32 %v1335, 0.5
    %v1848 = vadd.f32 %v1336, 0.5
    %v1849 = vadd.f32 %v1337, 0.5
    %v1850 = vadd.f32 %v1338, 0.5
    %v1851 = vadd.f32 %v1339, 0.5
    %v1852 = vadd.f32 %v1340, 0.5
    %v1853 = vadd.f32 %v1341, 0.5
    %v1854 = vadd.f32 %v1342, 0.5
    %v1855 = vadd.f32 %v1343, 0.5
    %v1856 = vadd.f32 %v1344, 0.5
    %v1857 = vadd.f32 %v1345, 0.5
    %v1858 = vadd.f32 %v1346, 0.5
    %v1859 = vadd.f32 %v1347, 0.5
    %v1860 = vadd.f32 %v1348, 0.5
    %v1861 = vadd.f32 %v1349, 0.5
    %v1862 = vadd.f32 %v1350, 0.5
    %v1863 = vadd.f32 %v1351, 0.5
    %v1864 = vadd.f32 %v1352, 0.5
    %v1865 = vadd.f32 %v1353, 0.5
    %v1866 = vadd.f32 %v1354, 0.5
    %v1867 = vadd.f32 %v1355, 0.5
    %v1868 = vadd.f32 %v1356, 0.5
    %v1869 = vadd.f32 %v1357, 0.5
    %v1870 = vadd.f32 %v1358, 0.5
    %v1871 = vadd.f32 %v1359, 0.5
    %v1872 = vadd.f32 %v1360, 0.5
    %v1873 = vadd.f32 %v1361, 0.5
    %v1874 = vadd.f32 %v1362, 0.5
    %v1875 = vadd.f32 %v1363, 0.5
    %v1876 = vadd.f32 %v1364, 0.5
    %v1877 = vadd.f32 %v1365, 0.5
    %v1878 = vadd.f32 %v1366, 0.5
    %v1879 = vadd.f32 %v1367, 0.5
    %v1880 = vadd.f32 %v1368, 0.5
    %v1881 = vadd.f32 %v1369, 0.5
    %v1882 = vadd.f32 %v1370, 0.5
    %v1883 = vadd.f32 %v1371, 0.5
    %v1884 = vadd.f32 %v1372, 0.5
    %v1885 = vadd.f32 %v1373, 0.5
    %v1886 = vadd.f32 %v1374, 0.5
    %v1887 = vadd.f32 %v1375, 0.5
    %v1888 = vadd.f32 %v1376, 0.5
    %v1889 = vadd.f32 %v1377, 0.5
    %v1890 = vadd.f32 %v1378, 0.5
    %v1891 = vadd.f32 %v1379, 0.5
    %v1892 = vadd.f32 %v1380, 0.5
    %v1893 = vadd.f32 %v1381, 0.5
    %v1894 = vadd.f32 %v1382, 0.5
    %v1895 = vadd.f32 %v1383, 0.5
    %v1896 = vadd.f32 %v1384, 0.5
    %v1897 = vadd.f32 %v1385, 0.5
    %v1898 = vadd.f32 %v1386, 0.5
    %v1899 = vadd.f32 %v1387, 0.5
    %v1900 = vadd.f32 %v1388, 0.5
    %v1901 = vadd.f32 %v1389, 0.5
    %v1902 = vadd.f32 %v1390, 0.5
    %v1903 = vadd.f32 %v1391, 0.5
    %v1904 = vadd.f32 %v1392, 0.5
    %v1905 = vadd.f32 %v1393, 0.5
    %v1906 = vadd.f32 %v1394, 0.5
    %v1907 = vadd.f32 %v1395, 0.5
    %v1908 = vadd.f32 %v1396, 0.5
    %v1909 = vadd.f32 %v1397, 0.5
    %v1910 = vadd.f32 %v1398, 0.5
    %v1911 = vadd.f32 %v1399, 0.5
    %v1912 = vadd.f32 %v1400, 0.5
    %v1913 = vadd.f32 %v1401, 0.5
    %v1914 = vadd.f32 %v1402, 0.5
    %v1915 = vadd.f32 %v1403, 0.5
    %v1916 = vadd.f32 %v1404, 0.5
    %v1917 = vadd.f32 %v1405, 0.5
    %v1918 = vadd.f32 %v1406, 0.5
    %v1919 = vadd.f32 %v1407, 0.5
    %v1920 = vadd.f32 %v1408, 0.5
    %v1921 = vadd.f32 %v1409, 0.5
    %v1922 = vadd.f32 %v1410, 0.5
    %v1923 = vadd.f32 %v1411, 0.5
    %v1924 = vadd.f32 %v1412, 0.5
    %v1925 = vadd.f32 %v1413, 0.5
    %v1926 = vadd.f32 %v1414, 0.5
    %v1927 = vadd.f32 %v1415, 0.5
    %v1928 = vadd.f32 %v1416, 0.5
    %v1929 = vadd.f32 %v1417, 0.5
    %v1930 = vadd.f32 %v1418, 0.5
    %v1931 = vadd.f32 %v1419, 0.5
    %v1932 = vadd.f32 %v1420, 0.5
    %v1933 = vadd.f32 %v1421, 0.5
    %v1934 = vadd.f32 %v1422, 0.5
    %v1935 = vadd.f32 %v1423, 0.5
    %v1936 = vadd.f32 %v1424, 0.5
    %v1937 = vadd.f32 %v1425, 0.5
    %v1938 = vadd.f32 %v1426, 0.5
    %v1939 = vadd.f32 %v1427, 0.5
    %v1940 = vadd.f32 %v1428, 0.5
    %v1941 = vadd.f32 %v1429, 0.5
    %v1942 = vadd.f32 %v1430, 0.5
    %v1943 = vadd.f32 %v1431, 0.5
    %v1944 = vadd.f32 %v1432, 0.5
    %v1945 = vadd.f32 %v1433, 0.5
    %v1946 = vadd.f32 %v1434, 0.5
    %v1947 = vadd.f32 %v1435, 0.5
    %v1948 = vadd.f32 %v1436, 0.5
    %v1949 = vadd.f32 %v1437, 0.5
    %v1950 = vadd.f32 %v1438, 0.5
    %v1951 = vadd.f32 %v1439, 0.5
    %v1952 = vadd.f32 %v1440, 0.5
    %v1953 = vadd.f32 %v1441, 0.5
    %v1954 = vadd.f32 %v1442, 0.5
    %v1955 = vadd.f32 %v1443, 0.5
    %v1956 = vadd.f32 %v1444, 0.5
    %v1957 = vadd.f32 %v1445, 0.5
    %v1958 = vadd.f32 %v1446, 0.5
    %v1959 = vadd.f32 %v1447, 0.5
    %v1960 = vadd.f32 %v1448, 0.5
    %v1961 = vadd.f32 %v1449, 0.5
    %v1962 = vadd.f32 %v1450, 0.5
    %v1963 = vadd.f32 %v1451, 0.5
    %v1964 = vadd.f32 %v1452, 0.5
    %v1965 = vadd.f32 %v1453, 0.5
    %v1966 = vadd.f32 %v1454, 0.5
    %v1967 = vadd.f32 %v1455, 0.5
    %v1968 = vadd.f32 %v1456, 0.5
    %v1969 = vadd.f32 %v1457, 0.5
    %v1970 = vadd.f32 %v1458, 0.5
    %v1971 = vadd.f32 %v1459, 0.5
    %v1972 = vadd.f32 %v1460, 0.5
    %v1973 = vadd.f32 %v1461, 0.5
    %v1974 = vadd.f32 %v1462, 0.5
    %v1975 = vadd.f32 %v1463, 0.5
    %v1976 = vadd.f32 %v1464, 0.5
    %v1977 = vadd.f32 %v1465, 0.5
    %v1978 = vadd.f32 %v1466, 0.5
    %v1979 = vadd.f32 %v1467, 0.5
    %v1980 = vadd.f32 %v1468, 0.5
    %v1981 = vadd.f32 %v1469, 0.5
    %v1982 = vadd.f32 %v1470, 0.5
    %v1983 = vadd.f32 %v1471, 0.5
    %v1984 = vadd.f32 %v1472, 0.5
    %v1985 = vadd.f32 %v1473, 0.5
    %v1986 = vadd.f32 %v1474, 0.5
    %v1987 = vadd.f32 %v1475, 0.5
    %v1988 = vadd.f32 %v1476, 0.5
    %v1989 = vadd.f32 %v1477, 0.5
    %v1990 = vadd.f32 %v1478, 0.5
    %v1991 = vadd.f32 %v1479, 0.5
    %v1992 = vadd.f32 %v1480, 0.5
    %v1993 = vadd.f32 %v1481, 0.5
    %v1994 = vadd.f32 %v1482, 0.5
    %v1995 = vadd.f32 %v1483, 0.5
    %v1996 = vadd.f32 %v1484, 0.5
    %v1997 = vadd.f32 %v1485, 0.5
    %v1998 = vadd.f32 %v1486, 0.5
    %v1999 = vadd.f32 %v1487, 0.5
    %v2000 = vadd.f32 %v1488, 0.5
    %v2001 = vadd.f32 %v1489, 0.5
    %v2002 = vadd.f32 %v1490, 0.5
    %v2003 = vadd.f32 %v1491, 0.5
    %v2004 = vadd.f32 %v1492, 0.5
    %v2005 = vadd.f32 %v1493, 0.5
    %v2006 = vadd.f32 %v1494, 0.5
    %v2007 = vadd.f32 %v1495, 0.5
    %v2008 = vadd.f32 %v1496, 0.5
    %v2009 = vadd.f32 %v1497, 0.5
    %v2010 = vadd.f32 %v1498, 0.5
    %v2011 = vadd.f32 %v1499, 0.5
    %v2012 = vadd.f32 %v1500, 0.5
    %v2013 = vadd.f32 %v1501, 0.5
    %v2014 = vadd.f32 %v1502, 0.5
    %v2015 = vadd.f32 %v1503, 0.5
    %v2016 = vadd.f32 %v1504, 0.5
    %v2017 = vadd.f32 %v1505, 0.5
    %v2018 = vadd.f32 %v1506, 0.5
    %v2019 = vadd.f32 %v1507, 0.5
    %v2020 = vadd.f32 %v1508, 0.5
    %v2021 = vadd.f32 %v1509, 0.5
    %v2022 = vadd.f32 %v1510, 0.5
    %v2023 = vadd.f32 %v1511, 0.5
    %v2024 = vadd.f32 %v1512, 0.5
    %v2025 = vadd.f32 %v1513, 0.5
    %v2026 = vadd.f32 %v1514, 0.5
    %v2027 = vadd.f32 %v1515, 0.5
    %v2028 = vadd.f32 %v1516, 0.5
    %v2029 = vadd.f32 %v1517, 0.5
    %v2030 = vadd.f32 %v1518, 0.5
    %v2031 = vadd.f32 %v1519, 0.5
    %v2032 = vadd.f32 %v1520, 0.5
    %v2033 = vadd.f32 %v1521, 0.5
    %v2034 = vadd.f32 %v1522, 0.5
    %v2035 = vadd.f32 %v1523, 0.5
    %v2036 = vadd.f32 %v1524, 0.5
    %v2037 = vadd.f32 %v1525, 0.5
    %v2038 = vadd.f32 %v1526, 0.5
    %v2039 = vadd.f32 %v1527, 0.5
    %v2040 = vadd.f32 %v1528, 0.5
    %v2041 = vadd.f32 %v1529, 0.5
    %v2042 = vadd.f32 %v1530, 0.5
    %v2043 = vadd.f32 %v1531, 0.5
    %v2044 = vadd.f32 %v1532, 0.5
    %v2045 = vadd.f32 %v1533, 0.5
    %v2046 = vadd.f32 %v1534, 0.5
    %v2047 = vadd.f32 %v1535, 0.5
    %v2048 = vadd.f32 %v1536, 0.5
    %v2049 = vadd.f32 %v1537, 0.5
    %v2050 = vadd.f32 %v1538, 0.5
    %v2051 = vadd.f32 %v1539, 0.5
    %v2052 = vadd.f32 %v1540, 0.5
    %v2053 = vadd.f32 %v1541, 0.5
    %v2054 = vadd.f32 %v1542, 0.5
    %v2055 = vadd.f32 %v1543, 0.5
    %v2056 = vadd.f32 %v1544, 0.5
    %v2057 = vadd.f32 %v1545, 0.5
    %v2058 = vadd.f32 %v1546, 0.5
    %v2059 = vadd.f32 %v1547, 0.5
    %v2060 = vadd.f32 %v1548, 0.5
    %v2061 = vadd.f32 %v1549, 0.5
    %v2062 = vadd.f32 %v1550, 0.5
    %v2063 = vadd.f32 %v1551, 0.5
    %v2064 = vadd.f32 %v1552, 0.5
    %v2065 = vadd.f32 %v1553, 0.5
    %v2066 = vadd.f32 %v1554, 0.5
    %v2067 = vadd.f32 %v1555, 0.5
    %v2068 = vadd.f32 %v1556, 0.5
    %v2069 = vadd.f32 %v1557, 0.5
    %v2070 = vadd.f32 %v1558, 0.5
    %2071 = vst [vmem:[#allocation5] sm:$0xff] %v1559
    %2072 = vst [vmem:[#allocation5 + $0x8] sm:$0xff] %v1560
    %2073 = vst [vmem:[#allocation5 + $0x10] sm:$0xff] %v1561
    %2074 = vst [vmem:[#allocation5 + $0x18] sm:$0xff] %v1562
    %2075 = vst [vmem:[#allocation5 + $0x20] sm:$0xff] %v1563
    %2076 = vst [vmem:[#allocation5 + $0x28] sm:$0xff] %v1564
    %2077 = vst [vmem:[#allocation5 + $0x30] sm:$0xff] %v1565
    %2078 = vst [vmem:[#allocation5 + $0x38] sm:$0xff] %v1566
    %2079 = vst [vmem:[#allocation5 + $0x40] sm:$0xff] %v1567
    %2080 = vst [vmem:[#allocation5 + $0x48] sm:$0xff] %v1568
    %2081 = vst [vmem:[#allocation5 + $0x50] sm:$0xff] %v1569
    %2082 = vst [vmem:[#allocation5 + $0x58] sm:$0xff] %v1570
    %2083 = vst [vmem:[#allocation5 + $0x60] sm:$0xff] %v1571
    %2084 = vst [vmem:[#allocation5 + $0x68] sm:$0xff] %v1572
    %2085 = vst [vmem:[#allocation5 + $0x70] sm:$0xff] %v1573
    %2086 = vst [vmem:[#allocation5 + $0x78] sm:$0xff] %v1574
    %2087 = vst [vmem:[#allocation5 + $0x80] sm:$0xff] %v1575
    %2088 = vst [vmem:[#allocation5 + $0x88] sm:$0xff] %v1576
    %2089 = vst [vmem:[#allocation5 + $0x90] sm:$0xff] %v1577
    %2090 = vst [vmem:[#allocation5 + $0x98] sm:$0xff] %v1578
    %2091 = vst [vmem:[#allocation5 + $0xa0] sm:$0xff] %v1579
    %2092 = vst [vmem:[#allocation5 + $0xa8] sm:$0xff] %v1580
    %2093 = vst [vmem:[#allocation5 + $0xb0] sm:$0xff] %v1581
    %2094 = vst [vmem:[#allocation5 + $0xb8] sm:$0xff] %v1582
    %2095 = vst [vmem:[#allocation5 + $0xc0] sm:$0xff] %v1583
    %2096 = vst [vmem:[#allocation5 + $0xc8] sm:$0xff] %v1584
    %2097 = vst [vmem:[#allocation5 + $0xd0] sm:$0xff] %v1585
    %2098 = vst [vmem:[#allocation5 + $0xd8] sm:$0xff] %v1586
    %2099 = vst [vmem:[#allocation5 + $0xe0] sm:$0xff] %v1587
    %2100 = vst [vmem:[#allocation5 + $0xe8] sm:$0xff] %v1588
    %2101 = vst [vmem:[#allocation5 + $0xf0] sm:$0xff] %v1589
    %2102 = vst [vmem:[#allocation5 + $0xf8] sm:$0xff] %v1590
    %2103 = vst [vmem:[#allocation5 + $0x100] sm:$0xff] %v1591
    %2104 = vst [vmem:[#allocation5 + $0x108] sm:$0xff] %v1592
    %2105 = vst [vmem:[#allocation5 + $0x110] sm:$0xff] %v1593
    %2106 = vst [vmem:[#allocation5 + $0x118] sm:$0xff] %v1594
    %2107 = vst [vmem:[#allocation5 + $0x120] sm:$0xff] %v1595
    %2108 = vst [vmem:[#allocation5 + $0x128] sm:$0xff] %v1596
    %2109 = vst [vmem:[#allocation5 + $0x130] sm:$0xff] %v1597
    %2110 = vst [vmem:[#allocation5 + $0x138] sm:$0xff] %v1598
    %2111 = vst [vmem:[#allocation5 + $0x140] sm:$0xff] %v1599
    %2112 = vst [vmem:[#allocation5 + $0x148] sm:$0xff] %v1600
    %2113 = vst [vmem:[#allocation5 + $0x150] sm:$0xff] %v1601
    %2114 = vst [vmem:[#allocation5 + $0x158] sm:$0xff] %v1602
    %2115 = vst [vmem:[#allocation5 + $0x160] sm:$0xff] %v1603
    %2116 = vst [vmem:[#allocation5 + $0x168] sm:$0xff] %v1604
    %2117 = vst [vmem:[#allocation5 + $0x170] sm:$0xff] %v1605
    %2118 = vst [vmem:[#allocation5 + $0x178] sm:$0xff] %v1606
    %2119 = vst [vmem:[#allocation5 + $0x180] sm:$0xff] %v1607
    %2120 = vst [vmem:[#allocation5 + $0x188] sm:$0xff] %v1608
    %2121 = vst [vmem:[#allocation5 + $0x190] sm:$0xff] %v1609
    %2122 = vst [vmem:[#allocation5 + $0x198] sm:$0xff] %v1610
    %2123 = vst [vmem:[#allocation5 + $0x1a0] sm:$0xff] %v1611
    %2124 = vst [vmem:[#allocation5 + $0x1a8] sm:$0xff] %v1612
    %2125 = vst [vmem:[#allocation5 + $0x1b0] sm:$0xff] %v1613
    %2126 = vst [vmem:[#allocation5 + $0x1b8] sm:$0xff] %v1614
    %2127 = vst [vmem:[#allocation5 + $0x1c0] sm:$0xff] %v1615
    %2128 = vst [vmem:[#allocation5 + $0x1c8] sm:$0xff] %v1616
    %2129 = vst [vmem:[#allocation5 + $0x1d0] sm:$0xff] %v1617
    %2130 = vst [vmem:[#allocation5 + $0x1d8] sm:$0xff] %v1618
    %2131 = vst [vmem:[#allocation5 + $0x1e0] sm:$0xff] %v1619
    %2132 = vst [vmem:[#allocation5 + $0x1e8] sm:$0xff] %v1620
    %2133 = vst [vmem:[#allocation5 + $0x1f0] sm:$0xff] %v1621
    %2134 = vst [vmem:[#allocation5 + $0x1f8] sm:$0xff] %v1622
    %2135 = vst [vmem:[#allocation5 + $0x200] sm:$0xff] %v1623
    %2136 = vst [vmem:[#allocation5 + $0x208] sm:$0xff] %v1624
    %2137 = vst [vmem:[#allocation5 + $0x210] sm:$0xff] %v1625
    %2138 = vst [vmem:[#allocation5 + $0x218] sm:$0xff] %v1626
    %2139 = vst [vmem:[#allocation5 + $0x220] sm:$0xff] %v1627
    %2140 = vst [vmem:[#allocation5 + $0x228] sm:$0xff] %v1628
    %2141 = vst [vmem:[#allocation5 + $0x230] sm:$0xff] %v1629
    %2142 = vst [vmem:[#allocation5 + $0x238] sm:$0xff] %v1630
    %2143 = vst [vmem:[#allocation5 + $0x240] sm:$0xff] %v1631
    %2144 = vst [vmem:[#allocation5 + $0x248] sm:$0xff] %v1632
    %2145 = vst [vmem:[#allocation5 + $0x250] sm:$0xff] %v1633
    %2146 = vst [vmem:[#allocation5 + $0x258] sm:$0xff] %v1634
    %2147 = vst [vmem:[#allocation5 + $0x260] sm:$0xff] %v1635
    %2148 = vst [vmem:[#allocation5 + $0x268] sm:$0xff] %v1636
    %2149 = vst [vmem:[#allocation5 + $0x270] sm:$0xff] %v1637
    %2150 = vst [vmem:[#allocation5 + $0x278] sm:$0xff] %v1638
    %2151 = vst [vmem:[#allocation5 + $0x280] sm:$0xff] %v1639
    %2152 = vst [vmem:[#allocation5 + $0x288] sm:$0xff] %v1640
    %2153 = vst [vmem:[#allocation5 + $0x290] sm:$0xff] %v1641
    %2154 = vst [vmem:[#allocation5 + $0x298] sm:$0xff] %v1642
    %2155 = vst [vmem:[#allocation5 + $0x2a0] sm:$0xff] %v1643
    %2156 = vst [vmem:[#allocation5 + $0x2a8] sm:$0xff] %v1644
    %2157 = vst [vmem:[#allocation5 + $0x2b0] sm:$0xff] %v1645
    %2158 = vst [vmem:[#allocation5 + $0x2b8] sm:$0xff] %v1646
    %2159 = vst [vmem:[#allocation5 + $0x2c0] sm:$0xff] %v1647
    %2160 = vst [vmem:[#allocation5 + $0x2c8] sm:$0xff] %v1648
    %2161 = vst [vmem:[#allocation5 + $0x2d0] sm:$0xff] %v1649
    %2162 = vst [vmem:[#allocation5 + $0x2d8] sm:$0xff] %v1650
    %2163 = vst [vmem:[#allocation5 + $0x2e0] sm:$0xff] %v1651
    %2164 = vst [vmem:[#allocation5 + $0x2e8] sm:$0xff] %v1652
    %2165 = vst [vmem:[#allocation5 + $0x2f0] sm:$0xff] %v1653
    %2166 = vst [vmem:[#allocation5 + $0x2f8] sm:$0xff] %v1654
    %2167 = vst [vmem:[#allocation5 + $0x300] sm:$0xff] %v1655
    %2168 = vst [vmem:[#allocation5 + $0x308] sm:$0xff] %v1656
    %2169 = vst [vmem:[#allocation5 + $0x310] sm:$0xff] %v1657
    %2170 = vst [vmem:[#allocation5 + $0x318] sm:$0xff] %v1658
    %2171 = vst [vmem:[#allocation5 + $0x320] sm:$0xff] %v1659
    %2172 = vst [vmem:[#allocation5 + $0x328] sm:$0xff] %v1660
    %2173 = vst [vmem:[#allocation5 + $0x330] sm:$0xff] %v1661
    %2174 = vst [vmem:[#allocation5 + $0x338] sm:$0xff] %v1662
    %2175 = vst [vmem:[#allocation5 + $0x340] sm:$0xff] %v1663
    %2176 = vst [vmem:[#allocation5 + $0x348] sm:$0xff] %v1664
    %2177 = vst [vmem:[#allocation5 + $0x350] sm:$0xff] %v1665
    %2178 = vst [vmem:[#allocation5 + $0x358] sm:$0xff] %v1666
    %2179 = vst [vmem:[#allocation5 + $0x360] sm:$0xff] %v1667
    %2180 = vst [vmem:[#allocation5 + $0x368] sm:$0xff] %v1668
    %2181 = vst [vmem:[#allocation5 + $0x370] sm:$0xff] %v1669
    %2182 = vst [vmem:[#allocation5 + $0x378] sm:$0xff] %v1670
    %2183 = vst [vmem:[#allocation5 + $0x380] sm:$0xff] %v1671
    %2184 = vst [vmem:[#allocation5 + $0x388] sm:$0xff] %v1672
    %2185 = vst [vmem:[#allocation5 + $0x390] sm:$0xff] %v1673
    %2186 = vst [vmem:[#allocation5 + $0x398] sm:$0xff] %v1674
    %2187 = vst [vmem:[#allocation5 + $0x3a0] sm:$0xff] %v1675
    %2188 = vst [vmem:[#allocation5 + $0x3a8] sm:$0xff] %v1676
    %2189 = vst [vmem:[#allocation5 + $0x3b0] sm:$0xff] %v1677
    %2190 = vst [vmem:[#allocation5 + $0x3b8] sm:$0xff] %v1678
    %2191 = vst [vmem:[#allocation5 + $0x3c0] sm:$0xff] %v1679
    %2192 = vst [vmem:[#allocation5 + $0x3c8] sm:$0xff] %v1680
    %2193 = vst [vmem:[#allocation5 + $0x3d0] sm:$0xff] %v1681
    %2194 = vst [vmem:[#allocation5 + $0x3d8] sm:$0xff] %v1682
    %2195 = vst [vmem:[#allocation5 + $0x3e0] sm:$0xff] %v1683
    %2196 = vst [vmem:[#allocation5 + $0x3e8] sm:$0xff] %v1684
    %2197 = vst [vmem:[#allocation5 + $0x3f0] sm:$0xff] %v1685
    %2198 = vst [vmem:[#allocation5 + $0x3f8] sm:$0xff] %v1686
    %2199 = vst [vmem:[#allocation5 + $0x400] sm:$0xff] %v1687
    %2200 = vst [vmem:[#allocation5 + $0x408] sm:$0xff] %v1688
    %2201 = vst [vmem:[#allocation5 + $0x410] sm:$0xff] %v1689
    %2202 = vst [vmem:[#allocation5 + $0x418] sm:$0xff] %v1690
    %2203 = vst [vmem:[#allocation5 + $0x420] sm:$0xff] %v1691
    %2204 = vst [vmem:[#allocation5 + $0x428] sm:$0xff] %v1692
    %2205 = vst [vmem:[#allocation5 + $0x430] sm:$0xff] %v1693
    %2206 = vst [vmem:[#allocation5 + $0x438] sm:$0xff] %v1694
    %2207 = vst [vmem:[#allocation5 + $0x440] sm:$0xff] %v1695
    %2208 = vst [vmem:[#allocation5 + $0x448] sm:$0xff] %v1696
    %2209 = vst [vmem:[#allocation5 + $0x450] sm:$0xff] %v1697
    %2210 = vst [vmem:[#allocation5 + $0x458] sm:$0xff] %v1698
    %2211 = vst [vmem:[#allocation5 + $0x460] sm:$0xff] %v1699
    %2212 = vst [vmem:[#allocation5 + $0x468] sm:$0xff] %v1700
    %2213 = vst [vmem:[#allocation5 + $0x470] sm:$0xff] %v1701
    %2214 = vst [vmem:[#allocation5 + $0x478] sm:$0xff] %v1702
    %2215 = vst [vmem:[#allocation5 + $0x480] sm:$0xff] %v1703
    %2216 = vst [vmem:[#allocation5 + $0x488] sm:$0xff] %v1704
    %2217 = vst [vmem:[#allocation5 + $0x490] sm:$0xff] %v1705
    %2218 = vst [vmem:[#allocation5 + $0x498] sm:$0xff] %v1706
    %2219 = vst [vmem:[#allocation5 + $0x4a0] sm:$0xff] %v1707
    %2220 = vst [vmem:[#allocation5 + $0x4a8] sm:$0xff] %v1708
    %2221 = vst [vmem:[#allocation5 + $0x4b0] sm:$0xff] %v1709
    %2222 = vst [vmem:[#allocation5 + $0x4b8] sm:$0xff] %v1710
    %2223 = vst [vmem:[#allocation5 + $0x4c0] sm:$0xff] %v1711
    %2224 = vst [vmem:[#allocation5 + $0x4c8] sm:$0xff] %v1712
    %2225 = vst [vmem:[#allocation5 + $0x4d0] sm:$0xff] %v1713
    %2226 = vst [vmem:[#allocation5 + $0x4d8] sm:$0xff] %v1714
    %2227 = vst [vmem:[#allocation5 + $0x4e0] sm:$0xff] %v1715
    %2228 = vst [vmem:[#allocation5 + $0x4e8] sm:$0xff] %v1716
    %2229 = vst [vmem:[#allocation5 + $0x4f0] sm:$0xff] %v1717
    %2230 = vst [vmem:[#allocation5 + $0x4f8] sm:$0xff] %v1718
    %2231 = vst [vmem:[#allocation5 + $0x500] sm:$0xff] %v1719
    %2232 = vst [vmem:[#allocation5 + $0x508] sm:$0xff] %v1720
    %2233 = vst [vmem:[#allocation5 + $0x510] sm:$0xff] %v1721
    %2234 = vst [vmem:[#allocation5 + $0x518] sm:$0xff] %v1722
    %2235 = vst [vmem:[#allocation5 + $0x520] sm:$0xff] %v1723
    %2236 = vst [vmem:[#allocation5 + $0x528] sm:$0xff] %v1724
    %2237 = vst [vmem:[#allocation5 + $0x530] sm:$0xff] %v1725
    %2238 = vst [vmem:[#allocation5 + $0x538] sm:$0xff] %v1726
    %2239 = vst [vmem:[#allocation5 + $0x540] sm:$0xff] %v1727
    %2240 = vst [vmem:[#allocation5 + $0x548] sm:$0xff] %v1728
    %2241 = vst [vmem:[#allocation5 + $0x550] sm:$0xff] %v1729
    %2242 = vst [vmem:[#allocation5 + $0x558] sm:$0xff] %v1730
    %2243 = vst [vmem:[#allocation5 + $0x560] sm:$0xff] %v1731
    %2244 = vst [vmem:[#allocation5 + $0x568] sm:$0xff] %v1732
    %2245 = vst [vmem:[#allocation5 + $0x570] sm:$0xff] %v1733
    %2246 = vst [vmem:[#allocation5 + $0x578] sm:$0xff] %v1734
    %2247 = vst [vmem:[#allocation5 + $0x580] sm:$0xff] %v1735
    %2248 = vst [vmem:[#allocation5 + $0x588] sm:$0xff] %v1736
    %2249 = vst [vmem:[#allocation5 + $0x590] sm:$0xff] %v1737
    %2250 = vst [vmem:[#allocation5 + $0x598] sm:$0xff] %v1738
    %2251 = vst [vmem:[#allocation5 + $0x5a0] sm:$0xff] %v1739
    %2252 = vst [vmem:[#allocation5 + $0x5a8] sm:$0xff] %v1740
    %2253 = vst [vmem:[#allocation5 + $0x5b0] sm:$0xff] %v1741
    %2254 = vst [vmem:[#allocation5 + $0x5b8] sm:$0xff] %v1742
    %2255 = vst [vmem:[#allocation5 + $0x5c0] sm:$0xff] %v1743
    %2256 = vst [vmem:[#allocation5 + $0x5c8] sm:$0xff] %v1744
    %2257 = vst [vmem:[#allocation5 + $0x5d0] sm:$0xff] %v1745
    %2258 = vst [vmem:[#allocation5 + $0x5d8] sm:$0xff] %v1746
    %2259 = vst [vmem:[#allocation5 + $0x5e0] sm:$0xff] %v1747
    %2260 = vst [vmem:[#allocation5 + $0x5e8] sm:$0xff] %v1748
    %2261 = vst [vmem:[#allocation5 + $0x5f0] sm:$0xff] %v1749
    %2262 = vst [vmem:[#allocation5 + $0x5f8] sm:$0xff] %v1750
    %2263 = vst [vmem:[#allocation5 + $0x600] sm:$0xff] %v1751
    %2264 = vst [vmem:[#allocation5 + $0x608] sm:$0xff] %v1752
    %2265 = vst [vmem:[#allocation5 + $0x610] sm:$0xff] %v1753
    %2266 = vst [vmem:[#allocation5 + $0x618] sm:$0xff] %v1754
    %2267 = vst [vmem:[#allocation5 + $0x620] sm:$0xff] %v1755
    %2268 = vst [vmem:[#allocation5 + $0x628] sm:$0xff] %v1756
    %2269 = vst [vmem:[#allocation5 + $0x630] sm:$0xff] %v1757
    %2270 = vst [vmem:[#allocation5 + $0x638] sm:$0xff] %v1758
    %2271 = vst [vmem:[#allocation5 + $0x640] sm:$0xff] %v1759
    %2272 = vst [vmem:[#allocation5 + $0x648] sm:$0xff] %v1760
    %2273 = vst [vmem:[#allocation5 + $0x650] sm:$0xff] %v1761
    %2274 = vst [vmem:[#allocation5 + $0x658] sm:$0xff] %v1762
    %2275 = vst [vmem:[#allocation5 + $0x660] sm:$0xff] %v1763
    %2276 = vst [vmem:[#allocation5 + $0x668] sm:$0xff] %v1764
    %2277 = vst [vmem:[#allocation5 + $0x670] sm:$0xff] %v1765
    %2278 = vst [vmem:[#allocation5 + $0x678] sm:$0xff] %v1766
    %2279 = vst [vmem:[#allocation5 + $0x680] sm:$0xff] %v1767
    %2280 = vst [vmem:[#allocation5 + $0x688] sm:$0xff] %v1768
    %2281 = vst [vmem:[#allocation5 + $0x690] sm:$0xff] %v1769
    %2282 = vst [vmem:[#allocation5 + $0x698] sm:$0xff] %v1770
    %2283 = vst [vmem:[#allocation5 + $0x6a0] sm:$0xff] %v1771
    %2284 = vst [vmem:[#allocation5 + $0x6a8] sm:$0xff] %v1772
    %2285 = vst [vmem:[#allocation5 + $0x6b0] sm:$0xff] %v1773
    %2286 = vst [vmem:[#allocation5 + $0x6b8] sm:$0xff] %v1774
    %2287 = vst [vmem:[#allocation5 + $0x6c0] sm:$0xff] %v1775
    %2288 = vst [vmem:[#allocation5 + $0x6c8] sm:$0xff] %v1776
    %2289 = vst [vmem:[#allocation5 + $0x6d0] sm:$0xff] %v1777
    %2290 = vst [vmem:[#allocation5 + $0x6d8] sm:$0xff] %v1778
    %2291 = vst [vmem:[#allocation5 + $0x6e0] sm:$0xff] %v1779
    %2292 = vst [vmem:[#allocation5 + $0x6e8] sm:$0xff] %v1780
    %2293 = vst [vmem:[#allocation5 + $0x6f0] sm:$0xff] %v1781
    %2294 = vst [vmem:[#allocation5 + $0x6f8] sm:$0xff] %v1782
    %2295 = vst [vmem:[#allocation5 + $0x700] sm:$0xff] %v1783
    %2296 = vst [vmem:[#allocation5 + $0x708] sm:$0xff] %v1784
    %2297 = vst [vmem:[#allocation5 + $0x710] sm:$0xff] %v1785
    %2298 = vst [vmem:[#allocation5 + $0x718] sm:$0xff] %v1786
    %2299 = vst [vmem:[#allocation5 + $0x720] sm:$0xff] %v1787
    %2300 = vst [vmem:[#allocation5 + $0x728] sm:$0xff] %v1788
    %2301 = vst [vmem:[#allocation5 + $0x730] sm:$0xff] %v1789
    %2302 = vst [vmem:[#allocation5 + $0x738] sm:$0xff] %v1790
    %2303 = vst [vmem:[#allocation5 + $0x740] sm:$0xff] %v1791
    %2304 = vst [vmem:[#allocation5 + $0x748] sm:$0xff] %v1792
    %2305 = vst [vmem:[#allocation5 + $0x750] sm:$0xff] %v1793
    %2306 = vst [vmem:[#allocation5 + $0x758] sm:$0xff] %v1794
    %2307 = vst [vmem:[#allocation5 + $0x760] sm:$0xff] %v1795
    %2308 = vst [vmem:[#allocation5 + $0x768] sm:$0xff] %v1796
    %2309 = vst [vmem:[#allocation5 + $0x770] sm:$0xff] %v1797
    %2310 = vst [vmem:[#allocation5 + $0x778] sm:$0xff] %v1798
    %2311 = vst [vmem:[#allocation5 + $0x780] sm:$0xff] %v1799
    %2312 = vst [vmem:[#allocation5 + $0x788] sm:$0xff] %v1800
    %2313 = vst [vmem:[#allocation5 + $0x790] sm:$0xff] %v1801
    %2314 = vst [vmem:[#allocation5 + $0x798] sm:$0xff] %v1802
    %2315 = vst [vmem:[#allocation5 + $0x7a0] sm:$0xff] %v1803
    %2316 = vst [vmem:[#allocation5 + $0x7a8] sm:$0xff] %v1804
    %2317 = vst [vmem:[#allocation5 + $0x7b0] sm:$0xff] %v1805
    %2318 = vst [vmem:[#allocation5 + $0x7b8] sm:$0xff] %v1806
    %2319 = vst [vmem:[#allocation5 + $0x7c0] sm:$0xff] %v1807
    %2320 = vst [vmem:[#allocation5 + $0x7c8] sm:$0xff] %v1808
    %2321 = vst [vmem:[#allocation5 + $0x7d0] sm:$0xff] %v1809
    %2322 = vst [vmem:[#allocation5 + $0x7d8] sm:$0xff] %v1810
    %2323 = vst [vmem:[#allocation5 + $0x7e0] sm:$0xff] %v1811
    %2324 = vst [vmem:[#allocation5 + $0x7e8] sm:$0xff] %v1812
    %2325 = vst [vmem:[#allocation5 + $0x7f0] sm:$0xff] %v1813
    %2326 = vst [vmem:[#allocation5 + $0x7f8] sm:$0xff] %v1814
    %2327 = vst [vmem:[#allocation5 + $0x800] sm:$0xff] %v1815
    %2328 = vst [vmem:[#allocation5 + $0x808] sm:$0xff] %v1816
    %2329 = vst [vmem:[#allocation5 + $0x810] sm:$0xff] %v1817
    %2330 = vst [vmem:[#allocation5 + $0x818] sm:$0xff] %v1818
    %2331 = vst [vmem:[#allocation5 + $0x820] sm:$0xff] %v1819
    %2332 = vst [vmem:[#allocation5 + $0x828] sm:$0xff] %v1820
    %2333 = vst [vmem:[#allocation5 + $0x830] sm:$0xff] %v1821
    %2334 = vst [vmem:[#allocation5 + $0x838] sm:$0xff] %v1822
    %2335 = vst [vmem:[#allocation5 + $0x840] sm:$0xff] %v1823
    %2336 = vst [vmem:[#allocation5 + $0x848] sm:$0xff] %v1824
    %2337 = vst [vmem:[#allocation5 + $0x850] sm:$0xff] %v1825
    %2338 = vst [vmem:[#allocation5 + $0x858] sm:$0xff] %v1826
    %2339 = vst [vmem:[#allocation5 + $0x860] sm:$0xff] %v1827
    %2340 = vst [vmem:[#allocation5 + $0x868] sm:$0xff] %v1828
    %2341 = vst [vmem:[#allocation5 + $0x870] sm:$0xff] %v1829
    %2342 = vst [vmem:[#allocation5 + $0x878] sm:$0xff] %v1830
    %2343 = vst [vmem:[#allocation5 + $0x880] sm:$0xff] %v1831
    %2344 = vst [vmem:[#allocation5 + $0x888] sm:$0xff] %v1832
    %2345 = vst [vmem:[#allocation5 + $0x890] sm:$0xff] %v1833
    %2346 = vst [vmem:[#allocation5 + $0x898] sm:$0xff] %v1834
    %2347 = vst [vmem:[#allocation5 + $0x8a0] sm:$0xff] %v1835
    %2348 = vst [vmem:[#allocation5 + $0x8a8] sm:$0xff] %v1836
    %2349 = vst [vmem:[#allocation5 + $0x8b0] sm:$0xff] %v1837
    %2350 = vst [vmem:[#allocation5 + $0x8b8] sm:$0xff] %v1838
    %2351 = vst [vmem:[#allocation5 + $0x8c0] sm:$0xff] %v1839
    %2352 = vst [vmem:[#allocation5 + $0x8c8] sm:$0xff] %v1840
    %2353 = vst [vmem:[#allocation5 + $0x8d0] sm:$0xff] %v1841
    %2354 = vst [vmem:[#allocation5 + $0x8d8] sm:$0xff] %v1842
    %2355 = vst [vmem:[#allocation5 + $0x8e0] sm:$0xff] %v1843
    %2356 = vst [vmem:[#allocation5 + $0x8e8] sm:$0xff] %v1844
    %2357 = vst [vmem:[#allocation5 + $0x8f0] sm:$0xff] %v1845
    %2358 = vst [vmem:[#allocation5 + $0x8f8] sm:$0xff] %v1846
    %2359 = vst [vmem:[#allocation5 + $0x900] sm:$0xff] %v1847
    %2360 = vst [vmem:[#allocation5 + $0x908] sm:$0xff] %v1848
    %2361 = vst [vmem:[#allocation5 + $0x910] sm:$0xff] %v1849
    %2362 = vst [vmem:[#allocation5 + $0x918] sm:$0xff] %v1850
    %2363 = vst [vmem:[#allocation5 + $0x920] sm:$0xff] %v1851
    %2364 = vst [vmem:[#allocation5 + $0x928] sm:$0xff] %v1852
    %2365 = vst [vmem:[#allocation5 + $0x930] sm:$0xff] %v1853
    %2366 = vst [vmem:[#allocation5 + $0x938] sm:$0xff] %v1854
    %2367 = vst [vmem:[#allocation5 + $0x940] sm:$0xff] %v1855
    %2368 = vst [vmem:[#allocation5 + $0x948] sm:$0xff] %v1856
    %2369 = vst [vmem:[#allocation5 + $0x950] sm:$0xff] %v1857
    %2370 = vst [vmem:[#allocation5 + $0x958] sm:$0xff] %v1858
    %2371 = vst [vmem:[#allocation5 + $0x960] sm:$0xff] %v1859
    %2372 = vst [vmem:[#allocation5 + $0x968] sm:$0xff] %v1860
    %2373 = vst [vmem:[#allocation5 + $0x970] sm:$0xff] %v1861
    %2374 = vst [vmem:[#allocation5 + $0x978] sm:$0xff] %v1862
    %2375 = vst [vmem:[#allocation5 + $0x980] sm:$0xff] %v1863
    %2376 = vst [vmem:[#allocation5 + $0x988] sm:$0xff] %v1864
    %2377 = vst [vmem:[#allocation5 + $0x990] sm:$0xff] %v1865
    %2378 = vst [vmem:[#allocation5 + $0x998] sm:$0xff] %v1866
    %2379 = vst [vmem:[#allocation5 + $0x9a0] sm:$0xff] %v1867
    %2380 = vst [vmem:[#allocation5 + $0x9a8] sm:$0xff] %v1868
    %2381 = vst [vmem:[#allocation5 + $0x9b0] sm:$0xff] %v1869
    %2382 = vst [vmem:[#allocation5 + $0x9b8] sm:$0xff] %v1870
    %2383 = vst [vmem:[#allocation5 + $0x9c0] sm:$0xff] %v1871
    %2384 = vst [vmem:[#allocation5 + $0x9c8] sm:$0xff] %v1872
    %2385 = vst [vmem:[#allocation5 + $0x9d0] sm:$0xff] %v1873
    %2386 = vst [vmem:[#allocation5 + $0x9d8] sm:$0xff] %v1874
    %2387 = vst [vmem:[#allocation5 + $0x9e0] sm:$0xff] %v1875
    %2388 = vst [vmem:[#allocation5 + $0x9e8] sm:$0xff] %v1876
    %2389 = vst [vmem:[#allocation5 + $0x9f0] sm:$0xff] %v1877
    %2390 = vst [vmem:[#allocation5 + $0x9f8] sm:$0xff] %v1878
    %2391 = vst [vmem:[#allocation5 + $0xa00] sm:$0xff] %v1879
    %2392 = vst [vmem:[#allocation5 + $0xa08] sm:$0xff] %v1880
    %2393 = vst [vmem:[#allocation5 + $0xa10] sm:$0xff] %v1881
    %2394 = vst [vmem:[#allocation5 + $0xa18] sm:$0xff] %v1882
    %2395 = vst [vmem:[#allocation5 + $0xa20] sm:$0xff] %v1883
    %2396 = vst [vmem:[#allocation5 + $0xa28] sm:$0xff] %v1884
    %2397 = vst [vmem:[#allocation5 + $0xa30] sm:$0xff] %v1885
    %2398 = vst [vmem:[#allocation5 + $0xa38] sm:$0xff] %v1886
    %2399 = vst [vmem:[#allocation5 + $0xa40] sm:$0xff] %v1887
    %2400 = vst [vmem:[#allocation5 + $0xa48] sm:$0xff] %v1888
    %2401 = vst [vmem:[#allocation5 + $0xa50] sm:$0xff] %v1889
    %2402 = vst [vmem:[#allocation5 + $0xa58] sm:$0xff] %v1890
    %2403 = vst [vmem:[#allocation5 + $0xa60] sm:$0xff] %v1891
    %2404 = vst [vmem:[#allocation5 + $0xa68] sm:$0xff] %v1892
    %2405 = vst [vmem:[#allocation5 + $0xa70] sm:$0xff] %v1893
    %2406 = vst [vmem:[#allocation5 + $0xa78] sm:$0xff] %v1894
    %2407 = vst [vmem:[#allocation5 + $0xa80] sm:$0xff] %v1895
    %2408 = vst [vmem:[#allocation5 + $0xa88] sm:$0xff] %v1896
    %2409 = vst [vmem:[#allocation5 + $0xa90] sm:$0xff] %v1897
    %2410 = vst [vmem:[#allocation5 + $0xa98] sm:$0xff] %v1898
    %2411 = vst [vmem:[#allocation5 + $0xaa0] sm:$0xff] %v1899
    %2412 = vst [vmem:[#allocation5 + $0xaa8] sm:$0xff] %v1900
    %2413 = vst [vmem:[#allocation5 + $0xab0] sm:$0xff] %v1901
    %2414 = vst [vmem:[#allocation5 + $0xab8] sm:$0xff] %v1902
    %2415 = vst [vmem:[#allocation5 + $0xac0] sm:$0xff] %v1903
    %2416 = vst [vmem:[#allocation5 + $0xac8] sm:$0xff] %v1904
    %2417 = vst [vmem:[#allocation5 + $0xad0] sm:$0xff] %v1905
    %2418 = vst [vmem:[#allocation5 + $0xad8] sm:$0xff] %v1906
    %2419 = vst [vmem:[#allocation5 + $0xae0] sm:$0xff] %v1907
    %2420 = vst [vmem:[#allocation5 + $0xae8] sm:$0xff] %v1908
    %2421 = vst [vmem:[#allocation5 + $0xaf0] sm:$0xff] %v1909
    %2422 = vst [vmem:[#allocation5 + $0xaf8] sm:$0xff] %v1910
    %2423 = vst [vmem:[#allocation5 + $0xb00] sm:$0xff] %v1911
    %2424 = vst [vmem:[#allocation5 + $0xb08] sm:$0xff] %v1912
    %2425 = vst [vmem:[#allocation5 + $0xb10] sm:$0xff] %v1913
    %2426 = vst [vmem:[#allocation5 + $0xb18] sm:$0xff] %v1914
    %2427 = vst [vmem:[#allocation5 + $0xb20] sm:$0xff] %v1915
    %2428 = vst [vmem:[#allocation5 + $0xb28] sm:$0xff] %v1916
    %2429 = vst [vmem:[#allocation5 + $0xb30] sm:$0xff] %v1917
    %2430 = vst [vmem:[#allocation5 + $0xb38] sm:$0xff] %v1918
    %2431 = vst [vmem:[#allocation5 + $0xb40] sm:$0xff] %v1919
    %2432 = vst [vmem:[#allocation5 + $0xb48] sm:$0xff] %v1920
    %2433 = vst [vmem:[#allocation5 + $0xb50] sm:$0xff] %v1921
    %2434 = vst [vmem:[#allocation5 + $0xb58] sm:$0xff] %v1922
    %2435 = vst [vmem:[#allocation5 + $0xb60] sm:$0xff] %v1923
    %2436 = vst [vmem:[#allocation5 + $0xb68] sm:$0xff] %v1924
    %2437 = vst [vmem:[#allocation5 + $0xb70] sm:$0xff] %v1925
    %2438 = vst [vmem:[#allocation5 + $0xb78] sm:$0xff] %v1926
    %2439 = vst [vmem:[#allocation5 + $0xb80] sm:$0xff] %v1927
    %2440 = vst [vmem:[#allocation5 + $0xb88] sm:$0xff] %v1928
    %2441 = vst [vmem:[#allocation5 + $0xb90] sm:$0xff] %v1929
    %2442 = vst [vmem:[#allocation5 + $0xb98] sm:$0xff] %v1930
    %2443 = vst [vmem:[#allocation5 + $0xba0] sm:$0xff] %v1931
    %2444 = vst [vmem:[#allocation5 + $0xba8] sm:$0xff] %v1932
    %2445 = vst [vmem:[#allocation5 + $0xbb0] sm:$0xff] %v1933
    %2446 = vst [vmem:[#allocation5 + $0xbb8] sm:$0xff] %v1934
    %2447 = vst [vmem:[#allocation5 + $0xbc0] sm:$0xff] %v1935
    %2448 = vst [vmem:[#allocation5 + $0xbc8] sm:$0xff] %v1936
    %2449 = vst [vmem:[#allocation5 + $0xbd0] sm:$0xff] %v1937
    %2450 = vst [vmem:[#allocation5 + $0xbd8] sm:$0xff] %v1938
    %2451 = vst [vmem:[#allocation5 + $0xbe0] sm:$0xff] %v1939
    %2452 = vst [vmem:[#allocation5 + $0xbe8] sm:$0xff] %v1940
    %2453 = vst [vmem:[#allocation5 + $0xbf0] sm:$0xff] %v1941
    %2454 = vst [vmem:[#allocation5 + $0xbf8] sm:$0xff] %v1942
    %2455 = vst [vmem:[#allocation5 + $0xc00] sm:$0xff] %v1943
    %2456 = vst [vmem:[#allocation5 + $0xc08] sm:$0xff] %v1944
    %2457 = vst [vmem:[#allocation5 + $0xc10] sm:$0xff] %v1945
    %2458 = vst [vmem:[#allocation5 + $0xc18] sm:$0xff] %v1946
    %2459 = vst [vmem:[#allocation5 + $0xc20] sm:$0xff] %v1947
    %2460 = vst [vmem:[#allocation5 + $0xc28] sm:$0xff] %v1948
    %2461 = vst [vmem:[#allocation5 + $0xc30] sm:$0xff] %v1949
    %2462 = vst [vmem:[#allocation5 + $0xc38] sm:$0xff] %v1950
    %2463 = vst [vmem:[#allocation5 + $0xc40] sm:$0xff] %v1951
    %2464 = vst [vmem:[#allocation5 + $0xc48] sm:$0xff] %v1952
    %2465 = vst [vmem:[#allocation5 + $0xc50] sm:$0xff] %v1953
    %2466 = vst [vmem:[#allocation5 + $0xc58] sm:$0xff] %v1954
    %2467 = vst [vmem:[#allocation5 + $0xc60] sm:$0xff] %v1955
    %2468 = vst [vmem:[#allocation5 + $0xc68] sm:$0xff] %v1956
    %2469 = vst [vmem:[#allocation5 + $0xc70] sm:$0xff] %v1957
    %2470 = vst [vmem:[#allocation5 + $0xc78] sm:$0xff] %v1958
    %2471 = vst [vmem:[#allocation5 + $0xc80] sm:$0xff] %v1959
    %2472 = vst [vmem:[#allocation5 + $0xc88] sm:$0xff] %v1960
    %2473 = vst [vmem:[#allocation5 + $0xc90] sm:$0xff] %v1961
    %2474 = vst [vmem:[#allocation5 + $0xc98] sm:$0xff] %v1962
    %2475 = vst [vmem:[#allocation5 + $0xca0] sm:$0xff] %v1963
    %2476 = vst [vmem:[#allocation5 + $0xca8] sm:$0xff] %v1964
    %2477 = vst [vmem:[#allocation5 + $0xcb0] sm:$0xff] %v1965
    %2478 = vst [vmem:[#allocation5 + $0xcb8] sm:$0xff] %v1966
    %2479 = vst [vmem:[#allocation5 + $0xcc0] sm:$0xff] %v1967
    %2480 = vst [vmem:[#allocation5 + $0xcc8] sm:$0xff] %v1968
    %2481 = vst [vmem:[#allocation5 + $0xcd0] sm:$0xff] %v1969
    %2482 = vst [vmem:[#allocation5 + $0xcd8] sm:$0xff] %v1970
    %2483 = vst [vmem:[#allocation5 + $0xce0] sm:$0xff] %v1971
    %2484 = vst [vmem:[#allocation5 + $0xce8] sm:$0xff] %v1972
    %2485 = vst [vmem:[#allocation5 + $0xcf0] sm:$0xff] %v1973
    %2486 = vst [vmem:[#allocation5 + $0xcf8] sm:$0xff] %v1974
    %2487 = vst [vmem:[#allocation5 + $0xd00] sm:$0xff] %v1975
    %2488 = vst [vmem:[#allocation5 + $0xd08] sm:$0xff] %v1976
    %2489 = vst [vmem:[#allocation5 + $0xd10] sm:$0xff] %v1977
    %2490 = vst [vmem:[#allocation5 + $0xd18] sm:$0xff] %v1978
    %2491 = vst [vmem:[#allocation5 + $0xd20] sm:$0xff] %v1979
    %2492 = vst [vmem:[#allocation5 + $0xd28] sm:$0xff] %v1980
    %2493 = vst [vmem:[#allocation5 + $0xd30] sm:$0xff] %v1981
    %2494 = vst [vmem:[#allocation5 + $0xd38] sm:$0xff] %v1982
    %2495 = vst [vmem:[#allocation5 + $0xd40] sm:$0xff] %v1983
    %2496 = vst [vmem:[#allocation5 + $0xd48] sm:$0xff] %v1984
    %2497 = vst [vmem:[#allocation5 + $0xd50] sm:$0xff] %v1985
    %2498 = vst [vmem:[#allocation5 + $0xd58] sm:$0xff] %v1986
    %2499 = vst [vmem:[#allocation5 + $0xd60] sm:$0xff] %v1987
    %2500 = vst [vmem:[#allocation5 + $0xd68] sm:$0xff] %v1988
    %2501 = vst [vmem:[#allocation5 + $0xd70] sm:$0xff] %v1989
    %2502 = vst [vmem:[#allocation5 + $0xd78] sm:$0xff] %v1990
    %2503 = vst [vmem:[#allocation5 + $0xd80] sm:$0xff] %v1991
    %2504 = vst [vmem:[#allocation5 + $0xd88] sm:$0xff] %v1992
    %2505 = vst [vmem:[#allocation5 + $0xd90] sm:$0xff] %v1993
    %2506 = vst [vmem:[#allocation5 + $0xd98] sm:$0xff] %v1994
    %2507 = vst [vmem:[#allocation5 + $0xda0] sm:$0xff] %v1995
    %2508 = vst [vmem:[#allocation5 + $0xda8] sm:$0xff] %v1996
    %2509 = vst [vmem:[#allocation5 + $0xdb0] sm:$0xff] %v1997
    %2510 = vst [vmem:[#allocation5 + $0xdb8] sm:$0xff] %v1998
    %2511 = vst [vmem:[#allocation5 + $0xdc0] sm:$0xff] %v1999
    %2512 = vst [vmem:[#allocation5 + $0xdc8] sm:$0xff] %v2000
    %2513 = vst [vmem:[#allocation5 + $0xdd0] sm:$0xff] %v2001
    %2514 = vst [vmem:[#allocation5 + $0xdd8] sm:$0xff] %v2002
    %2515 = vst [vmem:[#allocation5 + $0xde0] sm:$0xff] %v2003
    %2516 = vst [vmem:[#allocation5 + $0xde8] sm:$0xff] %v2004
    %2517 = vst [vmem:[#allocation5 + $0xdf0] sm:$0xff] %v2005
    %2518 = vst [vmem:[#allocation5 + $0xdf8] sm:$0xff] %v2006
    %2519 = vst [vmem:[#allocation5 + $0xe00] sm:$0xff] %v2007
    %2520 = vst [vmem:[#allocation5 + $0xe08] sm:$0xff] %v2008
    %2521 = vst [vmem:[#allocation5 + $0xe10] sm:$0xff] %v2009
    %2522 = vst [vmem:[#allocation5 + $0xe18] sm:$0xff] %v2010
    %2523 = vst [vmem:[#allocation5 + $0xe20] sm:$0xff] %v2011
    %2524 = vst [vmem:[#allocation5 + $0xe28] sm:$0xff] %v2012
    %2525 = vst [vmem:[#allocation5 + $0xe30] sm:$0xff] %v2013
    %2526 = vst [vmem:[#allocation5 + $0xe38] sm:$0xff] %v2014
    %2527 = vst [vmem:[#allocation5 + $0xe40] sm:$0xff] %v2015
    %2528 = vst [vmem:[#allocation5 + $0xe48] sm:$0xff] %v2016
    %2529 = vst [vmem:[#allocation5 + $0xe50] sm:$0xff] %v2017
    %2530 = vst [vmem:[#allocation5 + $0xe58] sm:$0xff] %v2018
    %2531 = vst [vmem:[#allocation5 + $0xe60] sm:$0xff] %v2019
    %2532 = vst [vmem:[#allocation5 + $0xe68] sm:$0xff] %v2020
    %2533 = vst [vmem:[#allocation5 + $0xe70] sm:$0xff] %v2021
    %2534 = vst [vmem:[#allocation5 + $0xe78] sm:$0xff] %v2022
    %2535 = vst [vmem:[#allocation5 + $0xe80] sm:$0xff] %v2023
    %2536 = vst [vmem:[#allocation5 + $0xe88] sm:$0xff] %v2024
    %2537 = vst [vmem:[#allocation5 + $0xe90] sm:$0xff] %v2025
    %2538 = vst [vmem:[#allocation5 + $0xe98] sm:$0xff] %v2026
    %2539 = vst [vmem:[#allocation5 + $0xea0] sm:$0xff] %v2027
    %2540 = vst [vmem:[#allocation5 + $0xea8] sm:$0xff] %v2028
    %2541 = vst [vmem:[#allocation5 + $0xeb0] sm:$0xff] %v2029
    %2542 = vst [vmem:[#allocation5 + $0xeb8] sm:$0xff] %v2030
    %2543 = vst [vmem:[#allocation5 + $0xec0] sm:$0xff] %v2031
    %2544 = vst [vmem:[#allocation5 + $0xec8] sm:$0xff] %v2032
    %2545 = vst [vmem:[#allocation5 + $0xed0] sm:$0xff] %v2033
    %2546 = vst [vmem:[#allocation5 + $0xed8] sm:$0xff] %v2034
    %2547 = vst [vmem:[#allocation5 + $0xee0] sm:$0xff] %v2035
    %2548 = vst [vmem:[#allocation5 + $0xee8] sm:$0xff] %v2036
    %2549 = vst [vmem:[#allocation5 + $0xef0] sm:$0xff] %v2037
    %2550 = vst [vmem:[#allocation5 + $0xef8] sm:$0xff] %v2038
    %2551 = vst [vmem:[#allocation5 + $0xf00] sm:$0xff] %v2039
    %2552 = vst [vmem:[#allocation5 + $0xf08] sm:$0xff] %v2040
    %2553 = vst [vmem:[#allocation5 + $0xf10] sm:$0xff] %v2041
    %2554 = vst [vmem:[#allocation5 + $0xf18] sm:$0xff] %v2042
    %2555 = vst [vmem:[#allocation5 + $0xf20] sm:$0xff] %v2043
    %2556 = vst [vmem:[#allocation5 + $0xf28] sm:$0xff] %v2044
    %2557 = vst [vmem:[#allocation5 + $0xf30] sm:$0xff] %v2045
    %2558 = vst [vmem:[#allocation5 + $0xf38] sm:$0xff] %v2046
    %2559 = vst [vmem:[#allocation5 + $0xf40] sm:$0xff] %v2047
    %2560 = vst [vmem:[#allocation5 + $0xf48] sm:$0xff] %v2048
    %2561 = vst [vmem:[#allocation5 + $0xf50] sm:$0xff] %v2049
    %2562 = vst [vmem:[#allocation5 + $0xf58] sm:$0xff] %v2050
    %2563 = vst [vmem:[#allocation5 + $0xf60] sm:$0xff] %v2051
    %2564 = vst [vmem:[#allocation5 + $0xf68] sm:$0xff] %v2052
    %2565 = vst [vmem:[#allocation5 + $0xf70] sm:$0xff] %v2053
    %2566 = vst [vmem:[#allocation5 + $0xf78] sm:$0xff] %v2054
    %2567 = vst [vmem:[#allocation5 + $0xf80] sm:$0xff] %v2055
    %2568 = vst [vmem:[#allocation5 + $0xf88] sm:$0xff] %v2056
    %2569 = vst [vmem:[#allocation5 + $0xf90] sm:$0xff] %v2057
    %2570 = vst [vmem:[#allocation5 + $0xf98] sm:$0xff] %v2058
    %2571 = vst [vmem:[#allocation5 + $0xfa0] sm:$0xff] %v2059
    %2572 = vst [vmem:[#allocation5 + $0xfa8] sm:$0xff] %v2060
    %2573 = vst [vmem:[#allocation5 + $0xfb0] sm:$0xff] %v2061
    %2574 = vst [vmem:[#allocation5 + $0xfb8] sm:$0xff] %v2062
    %2575 = vst [vmem:[#allocation5 + $0xfc0] sm:$0xff] %v2063
    %2576 = vst [vmem:[#allocation5 + $0xfc8] sm:$0xff] %v2064
    %2577 = vst [vmem:[#allocation5 + $0xfd0] sm:$0xff] %v2065
    %2578 = vst [vmem:[#allocation5 + $0xfd8] sm:$0xff] %v2066
    %2579 = vst [vmem:[#allocation5 + $0xfe0] sm:$0xff] %v2067
    %2580 = vst [vmem:[#allocation5 + $0xfe8] sm:$0xff] %v2068
    %2581 = vst [vmem:[#allocation5 + $0xff0] sm:$0xff] %v2069
    %2582 = vst [vmem:[#allocation5 + $0xff8] sm:$0xff] %v2070
    // Predicated region
    $region10: #{tpu_custom_call.1} parent=1 // pred_check
      _
    $region11: #{tpu_custom_call.1} parent=1 // pred_check_branch
      %2584 = sbr.rel (0) target = $region13
    $region12: #{tpu_custom_call.1} parent=1 // pred_region
      %s2586 = ssub.s32 65536, 65536
      %2587 = vsyncadd [#allocation4], %s2586
      %s2588 = sshll.u32 [#allocation5], 4
      %s2589 = int_to_ptr.vmem [resolvable:$true] %s2588
      %2594 = dma.vmem_to_hbm [thread:$0]  %s2589, 65536, %s1, [#allocation4], 128, 128, 8
    $region13: #{tpu_custom_call.1} parent=1 // pred_fallthru
      _
    // Predicated region
    $region14: #{tpu_custom_call.1} parent=1 // pred_check
      _
    $region15: #{tpu_custom_call.1} parent=1 // pred_check_branch
      %2596 = sbr.rel (0) target = $region17
    $region16: #{tpu_custom_call.1} parent=1 // pred_region
      %2597 = dma.done [#allocation4], 65536
    $region17: #{tpu_custom_call.1} parent=1 // pred_fallthru
      _
    %2598 = vsyncpa [#allocation3], 1
    %2599 = vsyncpa [#allocation4], 1

</llo_original>
